<compile_context>
chip_gen: v6e
topology: v6e:2x2x1
jax: 0.10.0
libtpu: 0.0.40
codegen_flags: <defaults>
</compile_context>

<pallas_src>
import jax
import jax.numpy as jnp
from jax.experimental import pallas as pl
from jax.experimental.pallas import tpu as pltpu


# ----------------------------------------------------------------------------
# Fused kernel: forward() + actor_forward() + critic_forward()
# ----------------------------------------------------------------------------
def sac_fused_kernel(obs_ref, act_ref,
                     fe_w, fe_b,
                     a_w1, a_b1, a_w2, a_b2, head_w, head_b,
                     c_w1_feat, c_w1_act, c_b1,
                     c1_w2, c1_b2, c2_w2, c2_b2, c_w3, c_b3,
                     out_ref):
    F = fe_w.shape[1]            # features_dim
    A = act_ref.shape[1]         # action_dim
    H = a_w1.shape[1]            # hidden (256)
    SLAB = out_ref.shape[1]      # lane-dense output width (multiple of 128)
    TB = obs_ref.shape[0]        # rows in this batch tile

    def linear(x, w_ref, b_ref):
        w = w_ref[...]
        # Matmul operands may be bf16 (cast here); accumulation stays f32.
        return jnp.dot(x.astype(w.dtype), w,
                       preferred_element_type=jnp.float32) + b_ref[...]

    # --- feature extractor: forward() ---
    # TODO(synk): feature_extractor is an injected sub-module in the PyTorch
    # code; synthesized here as a single Linear(obs_dim, features_dim) + ReLU.
    feat = jnp.maximum(linear(obs_ref[...], fe_w, fe_b), 0.0)          # (B, F)

    # --- actor: actor_forward() ---
    h = jnp.maximum(linear(feat, a_w1, a_b1), 0.0)                     # (B, H)
    h = jnp.maximum(linear(h, a_w2, a_b2), 0.0)                        # (B, H)
    heads = linear(h, head_w, head_b)                                  # (B, 2A) = [mean | log_std]
    col = jax.lax.broadcasted_iota(jnp.int32, heads.shape, 1)
    heads = jnp.where(col >= A, jnp.clip(heads, -20.0, 2.0), heads)    # clamp log_std half only

    # --- critics: critic_forward() ---
    # concat([features, actions], dim=1) expressed as a split-K matmul, so
    # feat never leaves registers and no masked scratch stores are needed.
    wf = c_w1_feat[...]
    h1 = jnp.dot(feat.astype(wf.dtype), wf, preferred_element_type=jnp.float32)
    h1 = h1 + jnp.dot(act_ref[...].astype(wf.dtype), c_w1_act[...],
                      preferred_element_type=jnp.float32)
    h1 = jnp.maximum(h1 + c_b1[...], 0.0)                              # (B, 2H) both critics
    # layer 2: per-critic (independent) 256 -> 256
    h2a = jnp.maximum(linear(h1[:, :H], c1_w2, c1_b2), 0.0)
    h2b = jnp.maximum(linear(h1[:, H:], c2_w2, c2_b2), 0.0)
    # layer 3: block-diagonal (2H, 2) weight -> single (B, 2) result [q1 | q2]
    h2 = jnp.concatenate([h2a, h2b], axis=1)                           # (B, 2H)
    q = linear(h2, c_w3, c_b3)                                         # (B, 2)

    # --- single lane-dense output slab: [feat | mean | log_std | q1 | q2 | 0] ---
    pad = SLAB - (F + 2 * A + 2)
    parts = [feat, heads, q]
    if pad > 0:
        parts.append(jnp.zeros((TB, pad), jnp.float32))
    out_ref[...] = jnp.concatenate(parts, axis=1)


# ----------------------------------------------------------------------------
# Wrapper
# ----------------------------------------------------------------------------
def sac_forward(obs, actions, params, *, tile_b=None):
    """Returns (features, mean, log_std, q1, q2)."""
    B, OBS = obs.shape
    A = actions.shape[1]
    F = params["fe_w"].shape[1]
    H = params["a_w1"].shape[1]
    SLAB = max(128, pl.cdiv(F + 2 * A + 2, 128) * 128)   # lane-dense output width

    # --- batch tile selection ---
    # Largest block (multiple of 8 rows) that leaves >= 2 grid blocks when
    # B > 8 so the "parallel" axis shards across both v7x TensorCores; capped
    # at 1024 rows (working set per 1024-row block is ~10 MB -> fits VMEM on
    # all generations).  B <= 8 stays a single block (cannot split further).
    if tile_b is None:
        if B <= 8:
            tile_b = B
        else:
            tile_b = min(1024, max(8, (B // 2 // 8) * 8))
    tile_b = max(1, min(tile_b, B))

    # Pad the batch to a multiple of tile_b instead of collapsing to one
    # whole-batch block (which can overflow v7x's 64 MiB VMEM for large B).
    n_blk = pl.cdiv(B, tile_b)
    B_pad = n_blk * tile_b
    if B_pad != B:
        obs = jnp.pad(obs, ((0, B_pad - B), (0, 0)))
        actions = jnp.pad(actions, ((0, B_pad - B), (0, 0)))

    grid = (n_blk,)

    def resident(arr):                  # weights/biases stay in VMEM across grid
        return pl.BlockSpec(arr.shape, lambda i: (0, 0))

    def batched(cols):                  # activations tiled along batch
        return pl.BlockSpec((tile_b, cols), lambda i: (i, 0))

    args = (obs, actions,
            params["fe_w"], params["fe_b"],
            params["a_w1"], params["a_b1"], params["a_w2"], params["a_b2"],
            params["head_w"], params["head_b"],
            params["c_w1_feat"], params["c_w1_act"], params["c_b1"],
            params["c1_w2"], params["c1_b2"], params["c2_w2"], params["c2_b2"],
            params["c_w3"], params["c_b3"])

    in_specs = [batched(OBS), batched(A)] + [resident(a) for a in args[2:]]

    flops = 2 * B_pad * (OBS * F                          # feature extractor
                         + F * H + H * H + H * 2 * A      # actor
                         + (F + A) * 2 * H + 2 * H * H + 2 * H * 2)  # critics
    bytes_accessed = sum(int(a.size) * a.dtype.itemsize for a in args) \
        + 4 * B_pad * SLAB

    slab = pl.pallas_call(
        sac_fused_kernel,
        out_shape=jax.ShapeDtypeStruct((B_pad, SLAB), jnp.float32),
        grid=grid,
        in_specs=in_specs,
        out_specs=batched(SLAB),
        compiler_params=pltpu.CompilerParams(
            dimension_semantics=("parallel",)),
        cost_estimate=pl.CostEstimate(flops=flops, transcendentals=0,
                                      bytes_accessed=bytes_accessed),
    )(*args)

    slab = slab[:B]
    feat = slab[:, :F]
    mean = slab[:, F:F + A]
    log_std = slab[:, F + A:F + 2 * A]
    q1 = slab[:, F + 2 * A:F + 2 * A + 1]
    q2 = slab[:, F + 2 * A + 1:F + 2 * A + 2]
    return feat, mean, log_std, q1, q2


# ----------------------------------------------------------------------------
# Parameter construction (PyTorch-style init) + fusion into kernel layout
# ----------------------------------------------------------------------------
def init_params(key, obs_dim, features_dim, action_dim, hidden=256):
    def linear(k, fan_in, fan_out):
        kw, kb = jax.random.split(k)
        lim = 1.0 / jnp.sqrt(fan_in)
        w = jax.random.uniform(kw, (fan_in, fan_out), jnp.float32, -lim, lim)
        b = jax.random.uniform(kb, (1, fan_out), jnp.float32, -lim, lim)
        return w, b

    ks = jax.random.split(key, 11)
    p = {}
    p["fe_w"], p["fe_b"] = linear(ks[0], obs_dim, features_dim)
    p["a_w1"], p["a_b1"] = linear(ks[1], features_dim, hidden)
    p["a_w2"], p["a_b2"] = linear(ks[2], hidden, hidden)
    p["mean_w"], p["mean_b"] = linear(ks[3], hidden, action_dim)
    p["logstd_w"], p["logstd_b"] = linear(ks[4], hidden, action_dim)
    p["c1_w1"], p["c1_b1"] = linear(ks[5], features_dim + action_dim, hidden)
    p["c1_w2"], p["c1_b2"] = linear(ks[6], hidden, hidden)
    p["c1_w3"], p["c1_b3"] = linear(ks[7], hidden, 1)
    p["c2_w1"], p["c2_b1"] = linear(ks[8], features_dim + action_dim, hidden)
    p["c2_w2"], p["c2_b2"] = linear(ks[9], hidden, hidden)
    p["c2_w3"], p["c2_b3"] = linear(ks[10], hidden, 1)
    return p


def fuse_params(p, *, matmul_dtype=jnp.float32):
    """Build the fused/merged weights the kernel consumes.

    matmul_dtype=jnp.bfloat16 casts the matmul OPERANDS only (weights here,
    activations inside the kernel); biases and accumulation stay f32.
    """
    F = p["fe_w"].shape[1]
    H = p["a_w1"].shape[1]

    def w(x):
        return x.astype(matmul_dtype)

    f = {
        "fe_w": w(p["fe_w"]), "fe_b": p["fe_b"],
        "a_w1": w(p["a_w1"]), "a_b1": p["a_b1"],
        "a_w2": w(p["a_w2"]), "a_b2": p["a_b2"],
        # mean / log_std heads merged on the output axis -> (H, 2A)
        "head_w": w(jnp.concatenate([p["mean_w"], p["logstd_w"]], axis=1)),
        "head_b": jnp.concatenate([p["mean_b"], p["logstd_b"]], axis=1),
        # critic layer-1 merged on the output axis AND split on the K axis
        # (feat rows / action rows) -> (F, 2H) and (A, 2H); no in-kernel concat.
        "c_w1_feat": w(jnp.concatenate([p["c1_w1"][:F], p["c2_w1"][:F]], axis=1)),
        "c_w1_act": w(jnp.concatenate([p["c1_w1"][F:], p["c2_w1"][F:]], axis=1)),
        "c_b1": jnp.concatenate([p["c1_b1"], p["c2_b1"]], axis=1),
        "c1_w2": w(p["c1_w2"]), "c1_b2": p["c1_b2"],
        "c2_w2": w(p["c2_w2"]), "c2_b2": p["c2_b2"],
    }
    # critic layer-3 as a block-diagonal (2H, 2) weight -> single (B, 2) matmul
    c_w3 = jnp.zeros((2 * H, 2), jnp.float32)
    c_w3 = c_w3.at[:H, 0:1].set(p["c1_w3"]).at[H:, 1:2].set(p["c2_w3"])
    f["c_w3"] = w(c_w3)
    f["c_b3"] = jnp.concatenate([p["c1_b3"], p["c2_b3"]], axis=1)
    return f


# ----------------------------------------------------------------------------
# Pure-JAX reference (unfused, matches PyTorch module exactly)
# ----------------------------------------------------------------------------
def reference(obs, actions, p):
    feat = jnp.maximum(obs @ p["fe_w"] + p["fe_b"], 0.0)
    h = jnp.maximum(feat @ p["a_w1"] + p["a_b1"], 0.0)
    h = jnp.maximum(h @ p["a_w2"] + p["a_b2"], 0.0)
    mean = h @ p["mean_w"] + p["mean_b"]
    log_std = jnp.clip(h @ p["logstd_w"] + p["logstd_b"], -20.0, 2.0)

    x = jnp.concatenate([feat, actions], axis=1)

    def q(w1, b1, w2, b2, w3, b3):
        hh = jnp.maximum(x @ w1 + b1, 0.0)
        hh = jnp.maximum(hh @ w2 + b2, 0.0)
        return hh @ w3 + b3

    q1 = q(p["c1_w1"], p["c1_b1"], p["c1_w2"], p["c1_b2"], p["c1_w3"], p["c1_b3"])
    q2 = q(p["c2_w1"], p["c2_b1"], p["c2_w2"], p["c2_b2"], p["c2_w3"], p["c2_b3"])
    return feat, mean, log_std, q1, q2


# ----------------------------------------------------------------------------
if __name__ == "__main__":
    B, OBS, FEAT, ACT = 8, 16, 32, 4

    key = jax.random.PRNGKey(0)
    k_obs, k_act, k_par = jax.random.split(key, 3)
    obs = jax.random.normal(k_obs, (B, OBS), jnp.float32)
    actions = jax.random.normal(k_act, (B, ACT), jnp.float32)

    raw = init_params(k_par, OBS, FEAT, ACT)
    ref_out = reference(obs, actions, raw)

    # --- f32 path: exact PyTorch parity ---
    params_f32 = fuse_params(raw, matmul_dtype=jnp.float32)
    out_f32 = sac_forward(obs, actions, params_f32)
    jax.block_until_ready(out_f32)
    for got, want in zip(out_f32, ref_out):
        assert got.shape == want.shape, "shape mismatch vs reference"
        assert jnp.allclose(got, want, atol=1e-4, rtol=1e-4), "f32 mismatch vs reference"

    # --- bf16-matmul path: perf config (f32 accumulation), looser tolerance ---
    params_bf16 = fuse_params(raw, matmul_dtype=jnp.bfloat16)
    out_bf16 = sac_forward(obs, actions, params_bf16)
    jax.block_until_ready(out_bf16)
    for got, want in zip(out_bf16, ref_out):
        assert jnp.allclose(got, want, atol=5e-2, rtol=5e-2), "bf16 mismatch vs reference"

    print("KERNEL_OK")
</pallas_src>

<mosaic_0001>
module attributes {stable_mosaic.version = 11 : i64} {
  func.func @sac_fused_kernel(%arg0: i32, %arg1: memref<8x16xf32, #tpu.memory_space<vmem>>, %arg2: memref<8x4xf32, #tpu.memory_space<vmem>>, %arg3: memref<16x32xf32, #tpu.memory_space<vmem>>, %arg4: memref<1x32xf32, #tpu.memory_space<vmem>>, %arg5: memref<32x256xf32, #tpu.memory_space<vmem>>, %arg6: memref<1x256xf32, #tpu.memory_space<vmem>>, %arg7: memref<256x256xf32, #tpu.memory_space<vmem>>, %arg8: memref<1x256xf32, #tpu.memory_space<vmem>>, %arg9: memref<256x8xf32, #tpu.memory_space<vmem>>, %arg10: memref<1x8xf32, #tpu.memory_space<vmem>>, %arg11: memref<32x512xf32, #tpu.memory_space<vmem>>, %arg12: memref<4x512xf32, #tpu.memory_space<vmem>>, %arg13: memref<1x512xf32, #tpu.memory_space<vmem>>, %arg14: memref<256x256xf32, #tpu.memory_space<vmem>>, %arg15: memref<1x256xf32, #tpu.memory_space<vmem>>, %arg16: memref<256x256xf32, #tpu.memory_space<vmem>>, %arg17: memref<1x256xf32, #tpu.memory_space<vmem>>, %arg18: memref<512x2xf32, #tpu.memory_space<vmem>>, %arg19: memref<1x2xf32, #tpu.memory_space<vmem>>, %arg20: memref<8x128xf32, #tpu.memory_space<vmem>>) attributes {dimension_semantics = [#tpu.dimension_semantics<parallel>], iteration_bounds = array<i64: 1>, scalar_prefetch = 0 : i64, scratch_operands = 0 : i64, tpu.core_type = #tpu.core_type<tc>, window_params = [{transform_indices = @transform_0, window_bounds = array<i64: 8, 16>}, {transform_indices = @transform_1, window_bounds = array<i64: 8, 4>}, {pipeline_mode = #tpu.pipeline_mode<synchronous>, transform_indices = @transform_2, window_bounds = array<i64: 16, 32>}, {pipeline_mode = #tpu.pipeline_mode<synchronous>, transform_indices = @transform_3, window_bounds = array<i64: 1, 32>}, {pipeline_mode = #tpu.pipeline_mode<synchronous>, transform_indices = @transform_4, window_bounds = array<i64: 32, 256>}, {pipeline_mode = #tpu.pipeline_mode<synchronous>, transform_indices = @transform_5, window_bounds = array<i64: 1, 256>}, {pipeline_mode = #tpu.pipeline_mode<synchronous>, transform_indices = @transform_6, window_bounds = array<i64: 256, 256>}, {pipeline_mode = #tpu.pipeline_mode<synchronous>, transform_indices = @transform_7, window_bounds = array<i64: 1, 256>}, {pipeline_mode = #tpu.pipeline_mode<synchronous>, transform_indices = @transform_8, window_bounds = array<i64: 256, 8>}, {pipeline_mode = #tpu.pipeline_mode<synchronous>, transform_indices = @transform_9, window_bounds = array<i64: 1, 8>}, {pipeline_mode = #tpu.pipeline_mode<synchronous>, transform_indices = @transform_10, window_bounds = array<i64: 32, 512>}, {pipeline_mode = #tpu.pipeline_mode<synchronous>, transform_indices = @transform_11, window_bounds = array<i64: 4, 512>}, {pipeline_mode = #tpu.pipeline_mode<synchronous>, transform_indices = @transform_12, window_bounds = array<i64: 1, 512>}, {pipeline_mode = #tpu.pipeline_mode<synchronous>, transform_indices = @transform_13, window_bounds = array<i64: 256, 256>}, {pipeline_mode = #tpu.pipeline_mode<synchronous>, transform_indices = @transform_14, window_bounds = array<i64: 1, 256>}, {pipeline_mode = #tpu.pipeline_mode<synchronous>, transform_indices = @transform_15, window_bounds = array<i64: 256, 256>}, {pipeline_mode = #tpu.pipeline_mode<synchronous>, transform_indices = @transform_16, window_bounds = array<i64: 1, 256>}, {pipeline_mode = #tpu.pipeline_mode<synchronous>, transform_indices = @transform_17, window_bounds = array<i64: 512, 2>}, {pipeline_mode = #tpu.pipeline_mode<synchronous>, transform_indices = @transform_18, window_bounds = array<i64: 1, 2>}, {transform_indices = @transform_19, window_bounds = array<i64: 8, 128>}]} {
    %c0 = arith.constant 0 : index
    %c0_0 = arith.constant 0 : index
    %0 = vector.load %arg1[%c0, %c0_0] : memref<8x16xf32, #tpu.memory_space<vmem>>, vector<8x16xf32>
    %c0_1 = arith.constant 0 : index
    %c0_2 = arith.constant 0 : index
    %1 = vector.load %arg3[%c0_1, %c0_2] : memref<16x32xf32, #tpu.memory_space<vmem>>, vector<16x32xf32>
    %cst = arith.constant dense<0.000000e+00> : vector<8x32xf32>
    %2 = tpu.matmul %0, %1, %cst {dimension_numbers = #tpu.dot_dimension_numbers<[1], [0], [0], [1], [0, 0, 1, 1], [], []>} : vector<8x16xf32>, vector<16x32xf32>, vector<8x32xf32> -> vector<8x32xf32>
    %c0_3 = arith.constant 0 : index
    %c0_4 = arith.constant 0 : index
    %3 = vector.load %arg4[%c0_3, %c0_4] : memref<1x32xf32, #tpu.memory_space<vmem>>, vector<1x32xf32>
    %4 = vector.broadcast %3 : vector<1x32xf32> to vector<8x32xf32>
    %5 = arith.addf %2, %4 : vector<8x32xf32>
    %cst_5 = arith.constant 0.000000e+00 : f32
    %6 = vector.broadcast %cst_5 : f32 to vector<8x32xf32>
    %7 = arith.maximumf %5, %6 : vector<8x32xf32>
    %c0_6 = arith.constant 0 : index
    %c0_7 = arith.constant 0 : index
    %8 = vector.load %arg5[%c0_6, %c0_7] : memref<32x256xf32, #tpu.memory_space<vmem>>, vector<32x256xf32>
    %cst_8 = arith.constant dense<0.000000e+00> : vector<8x256xf32>
    %9 = tpu.matmul %7, %8, %cst_8 {dimension_numbers = #tpu.dot_dimension_numbers<[1], [0], [0], [1], [0, 0, 1, 1], [], []>} : vector<8x32xf32>, vector<32x256xf32>, vector<8x256xf32> -> vector<8x256xf32>
    %c0_9 = arith.constant 0 : index
    %c0_10 = arith.constant 0 : index
    %10 = vector.load %arg6[%c0_9, %c0_10] : memref<1x256xf32, #tpu.memory_space<vmem>>, vector<1x256xf32>
    %11 = vector.broadcast %10 : vector<1x256xf32> to vector<8x256xf32>
    %12 = arith.addf %9, %11 : vector<8x256xf32>
    %cst_11 = arith.constant 0.000000e+00 : f32
    %13 = vector.broadcast %cst_11 : f32 to vector<8x256xf32>
    %14 = arith.maximumf %12, %13 : vector<8x256xf32>
    %c0_12 = arith.constant 0 : index
    %c0_13 = arith.constant 0 : index
    %15 = vector.load %arg7[%c0_12, %c0_13] : memref<256x256xf32, #tpu.memory_space<vmem>>, vector<256x256xf32>
    %cst_14 = arith.constant dense<0.000000e+00> : vector<8x256xf32>
    %16 = tpu.matmul %14, %15, %cst_14 {dimension_numbers = #tpu.dot_dimension_numbers<[1], [0], [0], [1], [0, 0, 1, 1], [], []>} : vector<8x256xf32>, vector<256x256xf32>, vector<8x256xf32> -> vector<8x256xf32>
    %c0_15 = arith.constant 0 : index
    %c0_16 = arith.constant 0 : index
    %17 = vector.load %arg8[%c0_15, %c0_16] : memref<1x256xf32, #tpu.memory_space<vmem>>, vector<1x256xf32>
    %18 = vector.broadcast %17 : vector<1x256xf32> to vector<8x256xf32>
    %19 = arith.addf %16, %18 : vector<8x256xf32>
    %cst_17 = arith.constant 0.000000e+00 : f32
    %20 = vector.broadcast %cst_17 : f32 to vector<8x256xf32>
    %21 = arith.maximumf %19, %20 : vector<8x256xf32>
    %c0_18 = arith.constant 0 : index
    %c0_19 = arith.constant 0 : index
    %22 = vector.load %arg9[%c0_18, %c0_19] : memref<256x8xf32, #tpu.memory_space<vmem>>, vector<256x8xf32>
    %cst_20 = arith.constant dense<0.000000e+00> : vector<8x8xf32>
    %23 = tpu.matmul %21, %22, %cst_20 {dimension_numbers = #tpu.dot_dimension_numbers<[1], [0], [0], [1], [0, 0, 1, 1], [], []>} : vector<8x256xf32>, vector<256x8xf32>, vector<8x8xf32> -> vector<8x8xf32>
    %c0_21 = arith.constant 0 : index
    %c0_22 = arith.constant 0 : index
    %24 = vector.load %arg10[%c0_21, %c0_22] : memref<1x8xf32, #tpu.memory_space<vmem>>, vector<1x8xf32>
    %25 = vector.broadcast %24 : vector<1x8xf32> to vector<8x8xf32>
    %26 = arith.addf %23, %25 : vector<8x8xf32>
    %27 = tpu.iota {dimensions = array<i32: 1>} : vector<8x8xi32>
    %c4_i32 = arith.constant 4 : i32
    %28 = vector.broadcast %c4_i32 : i32 to vector<8x8xi32>
    %29 = arith.cmpi sge, %27, %28 : vector<8x8xi32>
    %cst_23 = arith.constant -2.000000e+01 : f32
    %cst_24 = arith.constant 2.000000e+00 : f32
    %30 = vector.broadcast %cst_23 : f32 to vector<8x8xf32>
    %31 = arith.maximumf %30, %26 : vector<8x8xf32>
    %32 = vector.broadcast %cst_24 : f32 to vector<8x8xf32>
    %33 = arith.minimumf %32, %31 : vector<8x8xf32>
    %34 = arith.select %29, %33, %26 : vector<8x8xi1>, vector<8x8xf32>
    %c0_25 = arith.constant 0 : index
    %c0_26 = arith.constant 0 : index
    %35 = vector.load %arg11[%c0_25, %c0_26] : memref<32x512xf32, #tpu.memory_space<vmem>>, vector<32x512xf32>
    %cst_27 = arith.constant dense<0.000000e+00> : vector<8x512xf32>
    %36 = tpu.matmul %7, %35, %cst_27 {dimension_numbers = #tpu.dot_dimension_numbers<[1], [0], [0], [1], [0, 0, 1, 1], [], []>} : vector<8x32xf32>, vector<32x512xf32>, vector<8x512xf32> -> vector<8x512xf32>
    %c0_28 = arith.constant 0 : index
    %c0_29 = arith.constant 0 : index
    %37 = vector.load %arg2[%c0_28, %c0_29] : memref<8x4xf32, #tpu.memory_space<vmem>>, vector<8x4xf32>
    %c0_30 = arith.constant 0 : index
    %c0_31 = arith.constant 0 : index
    %38 = vector.load %arg12[%c0_30, %c0_31] : memref<4x512xf32, #tpu.memory_space<vmem>>, vector<4x512xf32>
    %cst_32 = arith.constant dense<0.000000e+00> : vector<8x512xf32>
    %39 = tpu.matmul %37, %38, %cst_32 {dimension_numbers = #tpu.dot_dimension_numbers<[1], [0], [0], [1], [0, 0, 1, 1], [], []>} : vector<8x4xf32>, vector<4x512xf32>, vector<8x512xf32> -> vector<8x512xf32>
    %40 = arith.addf %36, %39 : vector<8x512xf32>
    %c0_33 = arith.constant 0 : index
    %c0_34 = arith.constant 0 : index
    %41 = vector.load %arg13[%c0_33, %c0_34] : memref<1x512xf32, #tpu.memory_space<vmem>>, vector<1x512xf32>
    %42 = vector.broadcast %41 : vector<1x512xf32> to vector<8x512xf32>
    %43 = arith.addf %40, %42 : vector<8x512xf32>
    %cst_35 = arith.constant 0.000000e+00 : f32
    %44 = vector.broadcast %cst_35 : f32 to vector<8x512xf32>
    %45 = arith.maximumf %43, %44 : vector<8x512xf32>
    %46 = vector.extract_strided_slice %45 {offsets = [0, 0], sizes = [8, 256], strides = [1, 1]} : vector<8x512xf32> to vector<8x256xf32>
    %c0_36 = arith.constant 0 : index
    %c0_37 = arith.constant 0 : index
    %47 = vector.load %arg14[%c0_36, %c0_37] : memref<256x256xf32, #tpu.memory_space<vmem>>, vector<256x256xf32>
    %cst_38 = arith.constant dense<0.000000e+00> : vector<8x256xf32>
    %48 = tpu.matmul %46, %47, %cst_38 {dimension_numbers = #tpu.dot_dimension_numbers<[1], [0], [0], [1], [0, 0, 1, 1], [], []>} : vector<8x256xf32>, vector<256x256xf32>, vector<8x256xf32> -> vector<8x256xf32>
    %c0_39 = arith.constant 0 : index
    %c0_40 = arith.constant 0 : index
    %49 = vector.load %arg15[%c0_39, %c0_40] : memref<1x256xf32, #tpu.memory_space<vmem>>, vector<1x256xf32>
    %50 = vector.broadcast %49 : vector<1x256xf32> to vector<8x256xf32>
    %51 = arith.addf %48, %50 : vector<8x256xf32>
    %cst_41 = arith.constant 0.000000e+00 : f32
    %52 = vector.broadcast %cst_41 : f32 to vector<8x256xf32>
    %53 = arith.maximumf %51, %52 : vector<8x256xf32>
    %54 = vector.extract_strided_slice %45 {offsets = [0, 256], sizes = [8, 256], strides = [1, 1]} : vector<8x512xf32> to vector<8x256xf32>
    %c0_42 = arith.constant 0 : index
    %c0_43 = arith.constant 0 : index
    %55 = vector.load %arg16[%c0_42, %c0_43] : memref<256x256xf32, #tpu.memory_space<vmem>>, vector<256x256xf32>
    %cst_44 = arith.constant dense<0.000000e+00> : vector<8x256xf32>
    %56 = tpu.matmul %54, %55, %cst_44 {dimension_numbers = #tpu.dot_dimension_numbers<[1], [0], [0], [1], [0, 0, 1, 1], [], []>} : vector<8x256xf32>, vector<256x256xf32>, vector<8x256xf32> -> vector<8x256xf32>
    %c0_45 = arith.constant 0 : index
    %c0_46 = arith.constant 0 : index
    %57 = vector.load %arg17[%c0_45, %c0_46] : memref<1x256xf32, #tpu.memory_space<vmem>>, vector<1x256xf32>
    %58 = vector.broadcast %57 : vector<1x256xf32> to vector<8x256xf32>
    %59 = arith.addf %56, %58 : vector<8x256xf32>
    %cst_47 = arith.constant 0.000000e+00 : f32
    %60 = vector.broadcast %cst_47 : f32 to vector<8x256xf32>
    %61 = arith.maximumf %59, %60 : vector<8x256xf32>
    %62 = tpu.concatenate %53, %61 in 1 : vector<8x256xf32>, vector<8x256xf32> -> vector<8x512xf32>
    %c0_48 = arith.constant 0 : index
    %c0_49 = arith.constant 0 : index
    %63 = vector.load %arg18[%c0_48, %c0_49] : memref<512x2xf32, #tpu.memory_space<vmem>>, vector<512x2xf32>
    %cst_50 = arith.constant dense<0.000000e+00> : vector<8x2xf32>
    %64 = tpu.matmul %62, %63, %cst_50 {dimension_numbers = #tpu.dot_dimension_numbers<[1], [0], [0], [1], [0, 0, 1, 1], [], []>} : vector<8x512xf32>, vector<512x2xf32>, vector<8x2xf32> -> vector<8x2xf32>
    %c0_51 = arith.constant 0 : index
    %c0_52 = arith.constant 0 : index
    %65 = vector.load %arg19[%c0_51, %c0_52] : memref<1x2xf32, #tpu.memory_space<vmem>>, vector<1x2xf32>
    %66 = vector.broadcast %65 : vector<1x2xf32> to vector<8x2xf32>
    %67 = arith.addf %64, %66 : vector<8x2xf32>
    %cst_53 = arith.constant 0.000000e+00 : f32
    %68 = vector.broadcast %cst_53 : f32 to vector<8x86xf32>
    %69 = tpu.concatenate %7, %34, %67, %68 in 1 : vector<8x32xf32>, vector<8x8xf32>, vector<8x2xf32>, vector<8x86xf32> -> vector<8x128xf32>
    %c0_54 = arith.constant 0 : index
    %c0_55 = arith.constant 0 : index
    %70 = vector.load %arg20[%c0_54, %c0_55] : memref<8x128xf32, #tpu.memory_space<vmem>>, vector<8x128xf32>
    tpu.vector_store %arg20[%c0_54, %c0_55], %69 {strides = array<i32>} : memref<8x128xf32, #tpu.memory_space<vmem>>, vector<8x128xf32>,
    return
  }
  func.func @transform_0(%arg0: i32) -> (i32, i32) {
    %c0_i32 = arith.constant 0 : i32
    %c0_i32_0 = arith.constant 0 : i32
    return %arg0, %c0_i32 : i32, i32
  }
  func.func @transform_1(%arg0: i32) -> (i32, i32) {
    %c0_i32 = arith.constant 0 : i32
    %c0_i32_0 = arith.constant 0 : i32
    return %arg0, %c0_i32 : i32, i32
  }
  func.func @transform_2(%arg0: i32) -> (i32, i32) {
    %c0_i32 = arith.constant 0 : i32
    %c0_i32_0 = arith.constant 0 : i32
    %c0_i32_1 = arith.constant 0 : i32
    return %c0_i32, %c0_i32_0 : i32, i32
  }
  func.func @transform_3(%arg0: i32) -> (i32, i32) {
    %c0_i32 = arith.constant 0 : i32
    %c0_i32_0 = arith.constant 0 : i32
    %c0_i32_1 = arith.constant 0 : i32
    return %c0_i32, %c0_i32_0 : i32, i32
  }
  func.func @transform_4(%arg0: i32) -> (i32, i32) {
    %c0_i32 = arith.constant 0 : i32
    %c0_i32_0 = arith.constant 0 : i32
    %c0_i32_1 = arith.constant 0 : i32
    return %c0_i32, %c0_i32_0 : i32, i32
  }
  func.func @transform_5(%arg0: i32) -> (i32, i32) {
    %c0_i32 = arith.constant 0 : i32
    %c0_i32_0 = arith.constant 0 : i32
    %c0_i32_1 = arith.constant 0 : i32
    return %c0_i32, %c0_i32_0 : i32, i32
  }
  func.func @transform_6(%arg0: i32) -> (i32, i32) {
    %c0_i32 = arith.constant 0 : i32
    %c0_i32_0 = arith.constant 0 : i32
    %c0_i32_1 = arith.constant 0 : i32
    return %c0_i32, %c0_i32_0 : i32, i32
  }
  func.func @transform_7(%arg0: i32) -> (i32, i32) {
    %c0_i32 = arith.constant 0 : i32
    %c0_i32_0 = arith.constant 0 : i32
    %c0_i32_1 = arith.constant 0 : i32
    return %c0_i32, %c0_i32_0 : i32, i32
  }
  func.func @transform_8(%arg0: i32) -> (i32, i32) {
    %c0_i32 = arith.constant 0 : i32
    %c0_i32_0 = arith.constant 0 : i32
    %c0_i32_1 = arith.constant 0 : i32
    return %c0_i32, %c0_i32_0 : i32, i32
  }
  func.func @transform_9(%arg0: i32) -> (i32, i32) {
    %c0_i32 = arith.constant 0 : i32
    %c0_i32_0 = arith.constant 0 : i32
    %c0_i32_1 = arith.constant 0 : i32
    return %c0_i32, %c0_i32_0 : i32, i32
  }
  func.func @transform_10(%arg0: i32) -> (i32, i32) {
    %c0_i32 = arith.constant 0 : i32
    %c0_i32_0 = arith.constant 0 : i32
    %c0_i32_1 = arith.constant 0 : i32
    return %c0_i32, %c0_i32_0 : i32, i32
  }
  func.func @transform_11(%arg0: i32) -> (i32, i32) {
    %c0_i32 = arith.constant 0 : i32
    %c0_i32_0 = arith.constant 0 : i32
    %c0_i32_1 = arith.constant 0 : i32
    return %c0_i32, %c0_i32_0 : i32, i32
  }
  func.func @transform_12(%arg0: i32) -> (i32, i32) {
    %c0_i32 = arith.constant 0 : i32
    %c0_i32_0 = arith.constant 0 : i32
    %c0_i32_1 = arith.constant 0 : i32
    return %c0_i32, %c0_i32_0 : i32, i32
  }
  func.func @transform_13(%arg0: i32) -> (i32, i32) {
    %c0_i32 = arith.constant 0 : i32
    %c0_i32_0 = arith.constant 0 : i32
    %c0_i32_1 = arith.constant 0 : i32
    return %c0_i32, %c0_i32_0 : i32, i32
  }
  func.func @transform_14(%arg0: i32) -> (i32, i32) {
    %c0_i32 = arith.constant 0 : i32
    %c0_i32_0 = arith.constant 0 : i32
    %c0_i32_1 = arith.constant 0 : i32
    return %c0_i32, %c0_i32_0 : i32, i32
  }
  func.func @transform_15(%arg0: i32) -> (i32, i32) {
    %c0_i32 = arith.constant 0 : i32
    %c0_i32_0 = arith.constant 0 : i32
    %c0_i32_1 = arith.constant 0 : i32
    return %c0_i32, %c0_i32_0 : i32, i32
  }
  func.func @transform_16(%arg0: i32) -> (i32, i32) {
    %c0_i32 = arith.constant 0 : i32
    %c0_i32_0 = arith.constant 0 : i32
    %c0_i32_1 = arith.constant 0 : i32
    return %c0_i32, %c0_i32_0 : i32, i32
  }
  func.func @transform_17(%arg0: i32) -> (i32, i32) {
    %c0_i32 = arith.constant 0 : i32
    %c0_i32_0 = arith.constant 0 : i32
    %c0_i32_1 = arith.constant 0 : i32
    return %c0_i32, %c0_i32_0 : i32, i32
  }
  func.func @transform_18(%arg0: i32) -> (i32, i32) {
    %c0_i32 = arith.constant 0 : i32
    %c0_i32_0 = arith.constant 0 : i32
    %c0_i32_1 = arith.constant 0 : i32
    return %c0_i32, %c0_i32_0 : i32, i32
  }
  func.func @transform_19(%arg0: i32) -> (i32, i32) {
    %c0_i32 = arith.constant 0 : i32
    %c0_i32_0 = arith.constant 0 : i32
    return %arg0, %c0_i32 : i32, i32
  }
}

</mosaic_0001>

<llo_original>
// kernel: tpu_custom_call.1
$region0: #{tpu_custom_call.1}
  #allocation0 [shape = 'u32[]', space=smem, size = 0x4, offset = 0x4, fixed_abs, tag = 'smem constant byte address 0x4 - core index']
  #allocation1 [shape = 'u32[144,128]{1,0:T(1,128)}', space=vmem, size = 0x12000, scoped, tag = 'internal scratch']
  %s0 = inlined_call_operand.vmem [shape: f32[8,16], index: 0, kind: input, shape index: {}]
  %s1 = inlined_call_operand.vmem [shape: f32[8,4], index: 1, kind: input, shape index: {}]
  %s2 = inlined_call_operand.vmem [shape: f32[16,32], index: 2, kind: input, shape index: {}]
  %s3 = inlined_call_operand.vmem [shape: f32[1,32], index: 3, kind: input, shape index: {}]
  %s4 = inlined_call_operand.vmem [shape: f32[32,256], index: 4, kind: input, shape index: {}]
  %s5 = inlined_call_operand.vmem [shape: f32[1,256], index: 5, kind: input, shape index: {}]
  %s6 = inlined_call_operand.vmem [shape: f32[256,256], index: 6, kind: input, shape index: {}]
  %s7 = inlined_call_operand.vmem [shape: f32[1,256], index: 7, kind: input, shape index: {}]
  %s8 = inlined_call_operand.vmem [shape: f32[256,8], index: 8, kind: input, shape index: {}]
  %s9 = inlined_call_operand.vmem [shape: f32[1,8], index: 9, kind: input, shape index: {}]
  %s10 = inlined_call_operand.vmem [shape: f32[32,512], index: 10, kind: input, shape index: {}]
  %s11 = inlined_call_operand.vmem [shape: f32[4,512], index: 11, kind: input, shape index: {}]
  %s12 = inlined_call_operand.vmem [shape: f32[1,512], index: 12, kind: input, shape index: {}]
  %s13 = inlined_call_operand.hbm [shape: f32[256,256], index: 13, kind: input, shape index: {}]
  %s14 = inlined_call_operand.vmem [shape: f32[1,256], index: 14, kind: input, shape index: {}]
  %s15 = inlined_call_operand.hbm [shape: f32[256,256], index: 15, kind: input, shape index: {}]
  %s16 = inlined_call_operand.vmem [shape: f32[1,256], index: 16, kind: input, shape index: {}]
  %s17 = inlined_call_operand.vmem [shape: f32[512,2], index: 17, kind: input, shape index: {}]
  %s18 = inlined_call_operand.vmem [shape: f32[1,2], index: 18, kind: input, shape index: {}]
  %s19 = inlined_call_operand.hbm [shape: f32[8,128], index: 19, kind: output, shape index: {}]
  %s20 = sld [smem:[#allocation0]]
  $region94: #{tpu_custom_call.1} parent=0
    _
  %s22 = ssub.s32 1, %s20
  %s23 = scalar_select 0, %s22, %s20
  $region1: #{tpu_custom_call.1} parent=0
    #allocation2 [shape = 'u8[262144]{0}', space=vmem, size = 0x40000, scoped, tag = 'input window, operand 13, single buffered']
    #allocation3 [shape = 's32[1]{0}', space=sflag, size = 0x4, scoped, tag = 'scoped memory for tpu_custom_call.1']
    #allocation4 [shape = 's32[1]{0}', space=sflag, size = 0x4, scoped, tag = 'scoped memory for tpu_custom_call.1']
    #allocation5 [shape = 'u8[262144]{0}', space=vmem, size = 0x40000, scoped, tag = 'input window, operand 15, single buffered']
    #allocation6 [shape = 's32[1]{0}', space=sflag, size = 0x4, scoped, tag = 'scoped memory for tpu_custom_call.1']
    #allocation7 [shape = 'u8[4096]{0}', space=vmem, size = 0x1000, scoped, tag = 'output window, operand 0, single buffered']
    %24 = vsyncpa [#allocation3], 0
    %25 = vsyncpa [#allocation6], 0
    %26 = vsyncpa [#allocation4], 0
    // Predicated region
    $region2: #{tpu_custom_call.1} parent=1 // pred_check
      _
    $region3: #{tpu_custom_call.1} parent=1 // pred_check_branch
      %28 = sbr.rel (0) target = $region5
    $region4: #{tpu_custom_call.1} parent=1 // pred_region
      _
    $region5: #{tpu_custom_call.1} parent=1 // pred_fallthru
      _
    // Predicated region
    $region6: #{tpu_custom_call.1} parent=1 // pred_check
      _
    $region7: #{tpu_custom_call.1} parent=1 // pred_check_branch
      %30 = sbr.rel (0) target = $region9
    $region8: #{tpu_custom_call.1} parent=1 // pred_region
      _
    $region9: #{tpu_custom_call.1} parent=1 // pred_fallthru
      _
    // Predicated region
    $region10: #{tpu_custom_call.1} parent=1 // pred_check
      _
    $region11: #{tpu_custom_call.1} parent=1 // pred_check_branch
      %32 = sbr.rel (0) target = $region13
    $region12: #{tpu_custom_call.1} parent=1 // pred_region
      _
    $region13: #{tpu_custom_call.1} parent=1 // pred_fallthru
      _
    // Predicated region
    $region14: #{tpu_custom_call.1} parent=1 // pred_check
      _
    $region15: #{tpu_custom_call.1} parent=1 // pred_check_branch
      %34 = sbr.rel (0) target = $region17
    $region16: #{tpu_custom_call.1} parent=1 // pred_region
      _
    $region17: #{tpu_custom_call.1} parent=1 // pred_fallthru
      _
    // Predicated region
    $region18: #{tpu_custom_call.1} parent=1 // pred_check
      _
    $region19: #{tpu_custom_call.1} parent=1 // pred_check_branch
      %36 = sbr.rel (0) target = $region21
    $region20: #{tpu_custom_call.1} parent=1 // pred_region
      _
    $region21: #{tpu_custom_call.1} parent=1 // pred_fallthru
      _
    // Predicated region
    $region22: #{tpu_custom_call.1} parent=1 // pred_check
      _
    $region23: #{tpu_custom_call.1} parent=1 // pred_check_branch
      %38 = sbr.rel (0) target = $region25
    $region24: #{tpu_custom_call.1} parent=1 // pred_region
      _
    $region25: #{tpu_custom_call.1} parent=1 // pred_fallthru
      _
    // Predicated region
    $region26: #{tpu_custom_call.1} parent=1 // pred_check
      _
    $region27: #{tpu_custom_call.1} parent=1 // pred_check_branch
      %40 = sbr.rel (0) target = $region29
    $region28: #{tpu_custom_call.1} parent=1 // pred_region
      _
    $region29: #{tpu_custom_call.1} parent=1 // pred_fallthru
      _
    // Predicated region
    $region30: #{tpu_custom_call.1} parent=1 // pred_check
      _
    $region31: #{tpu_custom_call.1} parent=1 // pred_check_branch
      %42 = sbr.rel (0) target = $region33
    $region32: #{tpu_custom_call.1} parent=1 // pred_region
      _
    $region33: #{tpu_custom_call.1} parent=1 // pred_fallthru
      _
    // Predicated region
    $region34: #{tpu_custom_call.1} parent=1 // pred_check
      _
    $region35: #{tpu_custom_call.1} parent=1 // pred_check_branch
      %44 = sbr.rel (0) target = $region37
    $region36: #{tpu_custom_call.1} parent=1 // pred_region
      _
    $region37: #{tpu_custom_call.1} parent=1 // pred_fallthru
      _
    // Predicated region
    $region38: #{tpu_custom_call.1} parent=1 // pred_check
      _
    $region39: #{tpu_custom_call.1} parent=1 // pred_check_branch
      %46 = sbr.rel (0) target = $region41
    $region40: #{tpu_custom_call.1} parent=1 // pred_region
      _
    $region41: #{tpu_custom_call.1} parent=1 // pred_fallthru
      _
    // Predicated region
    $region42: #{tpu_custom_call.1} parent=1 // pred_check
      _
    $region43: #{tpu_custom_call.1} parent=1 // pred_check_branch
      %48 = sbr.rel (0) target = $region45
    $region44: #{tpu_custom_call.1} parent=1 // pred_region
      _
    $region45: #{tpu_custom_call.1} parent=1 // pred_fallthru
      _
    // Predicated region
    $region46: #{tpu_custom_call.1} parent=1 // pred_check
      _
    $region47: #{tpu_custom_call.1} parent=1 // pred_check_branch
      %50 = sbr.rel (0) target = $region49
    $region48: #{tpu_custom_call.1} parent=1 // pred_region
      _
    $region49: #{tpu_custom_call.1} parent=1 // pred_fallthru
      _
    // Predicated region
    $region50: #{tpu_custom_call.1} parent=1 // pred_check
      _
    $region51: #{tpu_custom_call.1} parent=1 // pred_check_branch
      %52 = sbr.rel (0) target = $region53
    $region52: #{tpu_custom_call.1} parent=1 // pred_region
      _
    $region53: #{tpu_custom_call.1} parent=1 // pred_fallthru
      _
    // Predicated region
    $region54: #{tpu_custom_call.1} parent=1 // pred_check
      _
    $region55: #{tpu_custom_call.1} parent=1 // pred_check_branch
      %54 = sbr.rel (0) target = $region57
    $region56: #{tpu_custom_call.1} parent=1 // pred_region
      %s56 = ssub.s32 8192, 8192
      %57 = vsyncadd [#allocation3], %s56
      %s58 = sshll.u32 [#allocation2], 4
      %s59 = int_to_ptr.vmem [resolvable:$true] %s58
      %64 = dma.hbm_to_vmem [thread:$0]  %s13, 8192, %s59, [#allocation3], 256, 256, 16
    $region57: #{tpu_custom_call.1} parent=1 // pred_fallthru
      _
    // Predicated region
    $region58: #{tpu_custom_call.1} parent=1 // pred_check
      _
    $region59: #{tpu_custom_call.1} parent=1 // pred_check_branch
      %66 = sbr.rel (0) target = $region61
    $region60: #{tpu_custom_call.1} parent=1 // pred_region
      _
    $region61: #{tpu_custom_call.1} parent=1 // pred_fallthru
      _
    // Predicated region
    $region62: #{tpu_custom_call.1} parent=1 // pred_check
      _
    $region63: #{tpu_custom_call.1} parent=1 // pred_check_branch
      %68 = sbr.rel (0) target = $region65
    $region64: #{tpu_custom_call.1} parent=1 // pred_region
      %s70 = ssub.s32 8192, 8192
      %71 = vsyncadd [#allocation6], %s70
      %s72 = sshll.u32 [#allocation5], 4
      %s73 = int_to_ptr.vmem [resolvable:$true] %s72
      %78 = dma.hbm_to_vmem [thread:$0]  %s15, 8192, %s73, [#allocation6], 256, 256, 16
    $region65: #{tpu_custom_call.1} parent=1 // pred_fallthru
      _
    // Predicated region
    $region66: #{tpu_custom_call.1} parent=1 // pred_check
      _
    $region67: #{tpu_custom_call.1} parent=1 // pred_check_branch
      %80 = sbr.rel (0) target = $region69
    $region68: #{tpu_custom_call.1} parent=1 // pred_region
      _
    $region69: #{tpu_custom_call.1} parent=1 // pred_fallthru
      _
    // Predicated region
    $region70: #{tpu_custom_call.1} parent=1 // pred_check
      _
    $region71: #{tpu_custom_call.1} parent=1 // pred_check_branch
      %82 = sbr.rel (0) target = $region73
    $region72: #{tpu_custom_call.1} parent=1 // pred_region
      _
    $region73: #{tpu_custom_call.1} parent=1 // pred_fallthru
      _
    // Predicated region
    $region74: #{tpu_custom_call.1} parent=1 // pred_check
      _
    $region75: #{tpu_custom_call.1} parent=1 // pred_check_branch
      %84 = sbr.rel (0) target = $region77
    $region76: #{tpu_custom_call.1} parent=1 // pred_region
      _
    $region77: #{tpu_custom_call.1} parent=1 // pred_fallthru
      _
    // Predicated region
    $region78: #{tpu_custom_call.1} parent=1 // pred_check
      _
    $region79: #{tpu_custom_call.1} parent=1 // pred_check_branch
      %86 = sbr.rel (0) target = $region81
    $region80: #{tpu_custom_call.1} parent=1 // pred_region
      %87 = dma.done [#allocation3], 8192
    $region81: #{tpu_custom_call.1} parent=1 // pred_fallthru
      _
    // Predicated region
    $region82: #{tpu_custom_call.1} parent=1 // pred_check
      _
    $region83: #{tpu_custom_call.1} parent=1 // pred_check_branch
      %89 = sbr.rel (0) target = $region85
    $region84: #{tpu_custom_call.1} parent=1 // pred_region
      %90 = dma.done [#allocation6], 8192
    $region85: #{tpu_custom_call.1} parent=1 // pred_fallthru
      _
    %v91 = vld [vmem:[%s0] sm:$0xff]
    %v92 = vld [vmem:[%s2] sm:$0xff]
    %v93 = vld [vmem:[%s2 + $0x8] sm:$0xff]
    %v94 = vld [vmem:[%s3] sm:$0x1]
    %v96 = vlaneseq
    %v97 = vshrl.u32 %v96, 7
    %v98 = vsub.s32 0, %v97
    %v99 = vrot.slane %v94, %v98
    %vm101 = vcmask 130048
    %v103 = vsel %vm101, %v91, 0
    %105 = vmatprep.subr.mxu0 0.0
    %106 = vmatpush1.msra.mxu0 0.0
    %107 = vmatprep.subr.mxu0 0.0
    %108 = vmatpush1.msra.mxu0 0.0
    %109 = vmatprep.subr.mxu0 0.0
    %110 = vmatpush1.msra.mxu0 0.0
    %111 = vmatprep.subr.mxu0 0.0
    %112 = vmatpush1.msra.mxu0 0.0
    %113 = vmatprep.subr.mxu0 0.0
    %114 = vmatpush1.msra.mxu0 0.0
    %115 = vmatprep.subr.mxu0 0.0
    %116 = vmatpush1.msra.mxu0 0.0
    %117 = vmatprep.subr.mxu0 0.0
    %118 = vmatpush1.msra.mxu0 0.0
    %119 = vmatprep.subr.mxu0 0.0
    %120 = vmatpush1.msra.mxu0 0.0
    %121 = vmatprep.subr.mxu0 0.0
    %122 = vmatpush1.msra.mxu0 0.0
    %123 = vmatprep.subr.mxu0 0.0
    %124 = vmatpush1.msra.mxu0 0.0
    %125 = vmatprep.subr.mxu0 0.0
    %126 = vmatpush1.msra.mxu0 0.0
    %127 = vmatprep.subr.mxu0 0.0
    %128 = vmatpush1.msra.mxu0 0.0
    %129 = vmatprep.subr.mxu0 0.0
    %130 = vmatpush1.msra.mxu0 0.0
    %131 = vmatprep.subr.mxu0 0.0
    %132 = vmatpush1.msra.mxu0 0.0
    %133 = vmatprep.subr.mxu0 0.0
    %134 = vmatpush1.msra.mxu0 %v93
    %135 = vmatprep.subr.mxu0 0.0
    %136 = vmatpush1.msra.mxu0 %v92
    %137 = vmatprep.subr.mxu0 0.0
    %138 = vmatpush2.msra.mxu0 0.0
    %139 = vmatprep.subr.mxu0 0.0
    %140 = vmatpush2.msra.mxu0 0.0
    %141 = vmatprep.subr.mxu0 0.0
    %142 = vmatpush2.msra.mxu0 0.0
    %143 = vmatprep.subr.mxu0 0.0
    %144 = vmatpush2.msra.mxu0 0.0
    %145 = vmatprep.subr.mxu0 0.0
    %146 = vmatpush2.msra.mxu0 0.0
    %147 = vmatprep.subr.mxu0 0.0
    %148 = vmatpush2.msra.mxu0 0.0
    %149 = vmatprep.subr.mxu0 0.0
    %150 = vmatpush2.msra.mxu0 0.0
    %151 = vmatprep.subr.mxu0 0.0
    %152 = vmatpush2.msra.mxu0 0.0
    %153 = vmatprep.subr.mxu0 0.0
    %154 = vmatpush2.msra.mxu0 0.0
    %155 = vmatprep.subr.mxu0 0.0
    %156 = vmatpush2.msra.mxu0 0.0
    %157 = vmatprep.subr.mxu0 0.0
    %158 = vmatpush2.msra.mxu0 0.0
    %159 = vmatprep.subr.mxu0 0.0
    %160 = vmatpush2.msra.mxu0 0.0
    %161 = vmatprep.subr.mxu0 0.0
    %162 = vmatpush2.msra.mxu0 0.0
    %163 = vmatprep.subr.mxu0 0.0
    %164 = vmatpush2.msra.mxu0 0.0
    %165 = vmatprep.subr.mxu0 0.0
    %166 = vmatpush2.msra.mxu0 0.0
    %167 = vmatprep.subr.mxu0 0.0
    %168 = vmatpush2.msra.mxu0 0.0
    %169 = vmatprep.mubr.f32.mxu0 0.0
    %170 = vmatmul.mubr.f32.gmra.mxu0 %v103
    %v171 = vpop.f32.mrf.mxu0
    %v172 = vadd.f32 %v99, %v171
    %v173 = vpop.f32.mrf.mxu0
    %174 = vdwg.mxu0
    %v175 = vmax.f32 %v172, 0.0
    %v176 = vld [vmem:[%s4] sm:$0xff]
    %v177 = vld [vmem:[%s4 + $0x8] sm:$0xff]
    %v178 = vld [vmem:[%s4 + $0x10] sm:$0xff]
    %v179 = vld [vmem:[%s4 + $0x18] sm:$0xff]
    %v180 = vld [vmem:[%s4 + $0x20] sm:$0xff]
    %v181 = vld [vmem:[%s4 + $0x28] sm:$0xff]
    %v182 = vld [vmem:[%s4 + $0x30] sm:$0xff]
    %v183 = vld [vmem:[%s4 + $0x38] sm:$0xff]
    %v184 = vld [vmem:[%s5] sm:$0x3]
    %v186 = vlaneseq
    %v187 = vshrl.u32 %v186, 7
    %v188 = vsub.s32 0, %v187
    %v189 = vrot.slane %v184, %v188
    %v190 = vlaneseq
    %v191 = vshrl.u32 %v190, 7
    %v192 = vsub.s32 1, %v191
    %v193 = vrot.slane %v184, %v192
    %vm196 = vcmask 261120
    %v198 = vsel %vm196, %v175, 0
    %200 = vmatprep.subr.mxu0 0.0
    %201 = vmatpush1.msra.mxu0 0.0
    %202 = vmatprep.subr.mxu0 0.0
    %203 = vmatpush1.msra.mxu0 0.0
    %204 = vmatprep.subr.mxu0 0.0
    %205 = vmatpush1.msra.mxu0 0.0
    %206 = vmatprep.subr.mxu0 0.0
    %207 = vmatpush1.msra.mxu0 0.0
    %208 = vmatprep.subr.mxu0 0.0
    %209 = vmatpush1.msra.mxu0 0.0
    %210 = vmatprep.subr.mxu0 0.0
    %211 = vmatpush1.msra.mxu0 0.0
    %212 = vmatprep.subr.mxu0 0.0
    %213 = vmatpush1.msra.mxu0 0.0
    %214 = vmatprep.subr.mxu0 0.0
    %215 = vmatpush1.msra.mxu0 0.0
    %216 = vmatprep.subr.mxu0 0.0
    %217 = vmatpush1.msra.mxu0 0.0
    %218 = vmatprep.subr.mxu0 0.0
    %219 = vmatpush1.msra.mxu0 0.0
    %220 = vmatprep.subr.mxu0 0.0
    %221 = vmatpush1.msra.mxu0 0.0
    %222 = vmatprep.subr.mxu0 0.0
    %223 = vmatpush1.msra.mxu0 0.0
    %224 = vmatprep.subr.mxu0 %v183
    %225 = vmatpush1.msra.mxu0 %v182
    %226 = vmatprep.subr.mxu0 %v181
    %227 = vmatpush1.msra.mxu0 %v180
    %228 = vmatprep.subr.mxu0 %v179
    %229 = vmatpush1.msra.mxu0 %v178
    %230 = vmatprep.subr.mxu0 %v177
    %231 = vmatpush1.msra.mxu0 %v176
    %232 = vmatprep.subr.mxu0 0.0
    %233 = vmatpush2.msra.mxu0 0.0
    %234 = vmatprep.subr.mxu0 0.0
    %235 = vmatpush2.msra.mxu0 0.0
    %236 = vmatprep.subr.mxu0 0.0
    %237 = vmatpush2.msra.mxu0 0.0
    %238 = vmatprep.subr.mxu0 0.0
    %239 = vmatpush2.msra.mxu0 0.0
    %240 = vmatprep.subr.mxu0 0.0
    %241 = vmatpush2.msra.mxu0 0.0
    %242 = vmatprep.subr.mxu0 0.0
    %243 = vmatpush2.msra.mxu0 0.0
    %244 = vmatprep.subr.mxu0 0.0
    %245 = vmatpush2.msra.mxu0 0.0
    %246 = vmatprep.subr.mxu0 0.0
    %247 = vmatpush2.msra.mxu0 0.0
    %248 = vmatprep.subr.mxu0 0.0
    %249 = vmatpush2.msra.mxu0 0.0
    %250 = vmatprep.subr.mxu0 0.0
    %251 = vmatpush2.msra.mxu0 0.0
    %252 = vmatprep.subr.mxu0 0.0
    %253 = vmatpush2.msra.mxu0 0.0
    %254 = vmatprep.subr.mxu0 0.0
    %255 = vmatpush2.msra.mxu0 0.0
    %256 = vmatprep.subr.mxu0 0.0
    %257 = vmatpush2.msra.mxu0 0.0
    %258 = vmatprep.subr.mxu0 0.0
    %259 = vmatpush2.msra.mxu0 0.0
    %260 = vmatprep.subr.mxu0 0.0
    %261 = vmatpush2.msra.mxu0 0.0
    %262 = vmatprep.subr.mxu0 0.0
    %263 = vmatpush2.msra.mxu0 0.0
    %264 = vmatprep.mubr.f32.mxu0 0.0
    %265 = vmatmul.mubr.f32.gmra.mxu0 %v198
    %v266 = vpop.f32.mrf.mxu0
    %v267 = vadd.f32 %v189, %v266
    %v268 = vpop.f32.mrf.mxu0
    %v269 = vadd.f32 %v193, %v268
    %270 = vdwg.mxu0
    %v271 = vmax.f32 %v267, 0.0
    %v272 = vmax.f32 %v269, 0.0
    %v273 = vld [vmem:[%s6] sm:$0xff]
    %v274 = vld [vmem:[%s6 + $0x8] sm:$0xff]
    %v275 = vld [vmem:[%s6 + $0x10] sm:$0xff]
    %v276 = vld [vmem:[%s6 + $0x18] sm:$0xff]
    %v277 = vld [vmem:[%s6 + $0x20] sm:$0xff]
    %v278 = vld [vmem:[%s6 + $0x28] sm:$0xff]
    %v279 = vld [vmem:[%s6 + $0x30] sm:$0xff]
    %v280 = vld [vmem:[%s6 + $0x38] sm:$0xff]
    %v281 = vld [vmem:[%s6 + $0x40] sm:$0xff]
    %v282 = vld [vmem:[%s6 + $0x48] sm:$0xff]
    %v283 = vld [vmem:[%s6 + $0x50] sm:$0xff]
    %v284 = vld [vmem:[%s6 + $0x58] sm:$0xff]
    %v285 = vld [vmem:[%s6 + $0x60] sm:$0xff]
    %v286 = vld [vmem:[%s6 + $0x68] sm:$0xff]
    %v287 = vld [vmem:[%s6 + $0x70] sm:$0xff]
    %v288 = vld [vmem:[%s6 + $0x78] sm:$0xff]
    %v289 = vld [vmem:[%s6 + $0x80] sm:$0xff]
    %v290 = vld [vmem:[%s6 + $0x88] sm:$0xff]
    %v291 = vld [vmem:[%s6 + $0x90] sm:$0xff]
    %v292 = vld [vmem:[%s6 + $0x98] sm:$0xff]
    %v293 = vld [vmem:[%s6 + $0xa0] sm:$0xff]
    %v294 = vld [vmem:[%s6 + $0xa8] sm:$0xff]
    %v295 = vld [vmem:[%s6 + $0xb0] sm:$0xff]
    %v296 = vld [vmem:[%s6 + $0xb8] sm:$0xff]
    %v297 = vld [vmem:[%s6 + $0xc0] sm:$0xff]
    %v298 = vld [vmem:[%s6 + $0xc8] sm:$0xff]
    %v299 = vld [vmem:[%s6 + $0xd0] sm:$0xff]
    %v300 = vld [vmem:[%s6 + $0xd8] sm:$0xff]
    %v301 = vld [vmem:[%s6 + $0xe0] sm:$0xff]
    %v302 = vld [vmem:[%s6 + $0xe8] sm:$0xff]
    %v303 = vld [vmem:[%s6 + $0xf0] sm:$0xff]
    %v304 = vld [vmem:[%s6 + $0xf8] sm:$0xff]
    %v305 = vld [vmem:[%s6 + $0x100] sm:$0xff]
    %v306 = vld [vmem:[%s6 + $0x108] sm:$0xff]
    %v307 = vld [vmem:[%s6 + $0x110] sm:$0xff]
    %v308 = vld [vmem:[%s6 + $0x118] sm:$0xff]
    %v309 = vld [vmem:[%s6 + $0x120] sm:$0xff]
    %v310 = vld [vmem:[%s6 + $0x128] sm:$0xff]
    %v311 = vld [vmem:[%s6 + $0x130] sm:$0xff]
    %v312 = vld [vmem:[%s6 + $0x138] sm:$0xff]
    %v313 = vld [vmem:[%s6 + $0x140] sm:$0xff]
    %v314 = vld [vmem:[%s6 + $0x148] sm:$0xff]
    %v315 = vld [vmem:[%s6 + $0x150] sm:$0xff]
    %v316 = vld [vmem:[%s6 + $0x158] sm:$0xff]
    %v317 = vld [vmem:[%s6 + $0x160] sm:$0xff]
    %v318 = vld [vmem:[%s6 + $0x168] sm:$0xff]
    %v319 = vld [vmem:[%s6 + $0x170] sm:$0xff]
    %v320 = vld [vmem:[%s6 + $0x178] sm:$0xff]
    %v321 = vld [vmem:[%s6 + $0x180] sm:$0xff]
    %v322 = vld [vmem:[%s6 + $0x188] sm:$0xff]
    %v323 = vld [vmem:[%s6 + $0x190] sm:$0xff]
    %v324 = vld [vmem:[%s6 + $0x198] sm:$0xff]
    %v325 = vld [vmem:[%s6 + $0x1a0] sm:$0xff]
    %v326 = vld [vmem:[%s6 + $0x1a8] sm:$0xff]
    %v327 = vld [vmem:[%s6 + $0x1b0] sm:$0xff]
    %v328 = vld [vmem:[%s6 + $0x1b8] sm:$0xff]
    %v329 = vld [vmem:[%s6 + $0x1c0] sm:$0xff]
    %v330 = vld [vmem:[%s6 + $0x1c8] sm:$0xff]
    %v331 = vld [vmem:[%s6 + $0x1d0] sm:$0xff]
    %v332 = vld [vmem:[%s6 + $0x1d8] sm:$0xff]
    %v333 = vld [vmem:[%s6 + $0x1e0] sm:$0xff]
    %v334 = vld [vmem:[%s6 + $0x1e8] sm:$0xff]
    %v335 = vld [vmem:[%s6 + $0x1f0] sm:$0xff]
    %v336 = vld [vmem:[%s6 + $0x1f8] sm:$0xff]
    %v337 = vld [vmem:[%s7] sm:$0x3]
    %v339 = vlaneseq
    %v340 = vshrl.u32 %v339, 7
    %v341 = vsub.s32 0, %v340
    %v342 = vrot.slane %v337, %v341
    %v343 = vlaneseq
    %v344 = vshrl.u32 %v343, 7
    %v345 = vsub.s32 1, %v344
    %v346 = vrot.slane %v337, %v345
    %349 = vmatprep.subr.mxu0 %v304
    %350 = vmatpush1.msra.mxu0 %v303
    %351 = vmatprep.subr.mxu0 %v302
    %352 = vmatpush1.msra.mxu0 %v301
    %353 = vmatprep.subr.mxu0 %v300
    %354 = vmatpush1.msra.mxu0 %v299
    %355 = vmatprep.subr.mxu0 %v298
    %356 = vmatpush1.msra.mxu0 %v297
    %357 = vmatprep.subr.mxu0 %v296
    %358 = vmatpush1.msra.mxu0 %v295
    %359 = vmatprep.subr.mxu0 %v294
    %360 = vmatpush1.msra.mxu0 %v293
    %361 = vmatprep.subr.mxu0 %v292
    %362 = vmatpush1.msra.mxu0 %v291
    %363 = vmatprep.subr.mxu0 %v290
    %364 = vmatpush1.msra.mxu0 %v289
    %365 = vmatprep.subr.mxu0 %v288
    %366 = vmatpush1.msra.mxu0 %v287
    %367 = vmatprep.subr.mxu0 %v286
    %368 = vmatpush1.msra.mxu0 %v285
    %369 = vmatprep.subr.mxu0 %v284
    %370 = vmatpush1.msra.mxu0 %v283
    %371 = vmatprep.subr.mxu0 %v282
    %372 = vmatpush1.msra.mxu0 %v281
    %373 = vmatprep.subr.mxu0 %v280
    %374 = vmatpush1.msra.mxu0 %v279
    %375 = vmatprep.subr.mxu0 %v278
    %376 = vmatpush1.msra.mxu0 %v277
    %377 = vmatprep.subr.mxu0 %v276
    %378 = vmatpush1.msra.mxu0 %v275
    %379 = vmatprep.subr.mxu0 %v274
    %380 = vmatpush1.msra.mxu0 %v273
    %381 = vmatprep.subr.mxu0 %v336
    %382 = vmatpush2.msra.mxu0 %v335
    %383 = vmatprep.subr.mxu0 %v334
    %384 = vmatpush2.msra.mxu0 %v333
    %385 = vmatprep.subr.mxu0 %v332
    %386 = vmatpush2.msra.mxu0 %v331
    %387 = vmatprep.subr.mxu0 %v330
    %388 = vmatpush2.msra.mxu0 %v329
    %389 = vmatprep.subr.mxu0 %v328
    %390 = vmatpush2.msra.mxu0 %v327
    %391 = vmatprep.subr.mxu0 %v326
    %392 = vmatpush2.msra.mxu0 %v325
    %393 = vmatprep.subr.mxu0 %v324
    %394 = vmatpush2.msra.mxu0 %v323
    %395 = vmatprep.subr.mxu0 %v322
    %396 = vmatpush2.msra.mxu0 %v321
    %397 = vmatprep.subr.mxu0 %v320
    %398 = vmatpush2.msra.mxu0 %v319
    %399 = vmatprep.subr.mxu0 %v318
    %400 = vmatpush2.msra.mxu0 %v317
    %401 = vmatprep.subr.mxu0 %v316
    %402 = vmatpush2.msra.mxu0 %v315
    %403 = vmatprep.subr.mxu0 %v314
    %404 = vmatpush2.msra.mxu0 %v313
    %405 = vmatprep.subr.mxu0 %v312
    %406 = vmatpush2.msra.mxu0 %v311
    %407 = vmatprep.subr.mxu0 %v310
    %408 = vmatpush2.msra.mxu0 %v309
    %409 = vmatprep.subr.mxu0 %v308
    %410 = vmatpush2.msra.mxu0 %v307
    %411 = vmatprep.subr.mxu0 %v306
    %412 = vmatpush2.msra.mxu0 %v305
    %413 = vmatprep.mubr.f32.mxu0 %v272
    %414 = vmatmul.mubr.f32.gmra.mxu0 %v271
    %v415 = vpop.f32.mrf.mxu0
    %v416 = vadd.f32 %v342, %v415
    %v417 = vpop.f32.mrf.mxu0
    %v418 = vadd.f32 %v346, %v417
    %419 = vdwg.mxu0
    %v420 = vmax.f32 %v416, 0.0
    %v421 = vmax.f32 %v418, 0.0
    %v422 = vld [vmem:[%s8] sm:$0xff]
    %v423 = vld [vmem:[%s8 + $0x8] sm:$0xff]
    %v424 = vld [vmem:[%s8 + $0x10] sm:$0xff]
    %v425 = vld [vmem:[%s8 + $0x18] sm:$0xff]
    %v426 = vld [vmem:[%s8 + $0x20] sm:$0xff]
    %v427 = vld [vmem:[%s8 + $0x28] sm:$0xff]
    %v428 = vld [vmem:[%s8 + $0x30] sm:$0xff]
    %v429 = vld [vmem:[%s8 + $0x38] sm:$0xff]
    %v430 = vld [vmem:[%s8 + $0x40] sm:$0xff]
    %v431 = vld [vmem:[%s8 + $0x48] sm:$0xff]
    %v432 = vld [vmem:[%s8 + $0x50] sm:$0xff]
    %v433 = vld [vmem:[%s8 + $0x58] sm:$0xff]
    %v434 = vld [vmem:[%s8 + $0x60] sm:$0xff]
    %v435 = vld [vmem:[%s8 + $0x68] sm:$0xff]
    %v436 = vld [vmem:[%s8 + $0x70] sm:$0xff]
    %v437 = vld [vmem:[%s8 + $0x78] sm:$0xff]
    %v438 = vld [vmem:[%s8 + $0x80] sm:$0xff]
    %v439 = vld [vmem:[%s8 + $0x88] sm:$0xff]
    %v440 = vld [vmem:[%s8 + $0x90] sm:$0xff]
    %v441 = vld [vmem:[%s8 + $0x98] sm:$0xff]
    %v442 = vld [vmem:[%s8 + $0xa0] sm:$0xff]
    %v443 = vld [vmem:[%s8 + $0xa8] sm:$0xff]
    %v444 = vld [vmem:[%s8 + $0xb0] sm:$0xff]
    %v445 = vld [vmem:[%s8 + $0xb8] sm:$0xff]
    %v446 = vld [vmem:[%s8 + $0xc0] sm:$0xff]
    %v447 = vld [vmem:[%s8 + $0xc8] sm:$0xff]
    %v448 = vld [vmem:[%s8 + $0xd0] sm:$0xff]
    %v449 = vld [vmem:[%s8 + $0xd8] sm:$0xff]
    %v450 = vld [vmem:[%s8 + $0xe0] sm:$0xff]
    %v451 = vld [vmem:[%s8 + $0xe8] sm:$0xff]
    %v452 = vld [vmem:[%s8 + $0xf0] sm:$0xff]
    %v453 = vld [vmem:[%s8 + $0xf8] sm:$0xff]
    %v454 = vld [vmem:[%s9] sm:$0x1]
    %v456 = vlaneseq
    %v457 = vshrl.u32 %v456, 7
    %v458 = vsub.s32 0, %v457
    %v459 = vrot.slane %v454, %v458
    %461 = vmatprep.subr.mxu0 0.0
    %462 = vmatpush1.msra.mxu0 %v437
    %463 = vmatprep.subr.mxu0 0.0
    %464 = vmatpush1.msra.mxu0 %v436
    %465 = vmatprep.subr.mxu0 0.0
    %466 = vmatpush1.msra.mxu0 %v435
    %467 = vmatprep.subr.mxu0 0.0
    %468 = vmatpush1.msra.mxu0 %v434
    %469 = vmatprep.subr.mxu0 0.0
    %470 = vmatpush1.msra.mxu0 %v433
    %471 = vmatprep.subr.mxu0 0.0
    %472 = vmatpush1.msra.mxu0 %v432
    %473 = vmatprep.subr.mxu0 0.0
    %474 = vmatpush1.msra.mxu0 %v431
    %475 = vmatprep.subr.mxu0 0.0
    %476 = vmatpush1.msra.mxu0 %v430
    %477 = vmatprep.subr.mxu0 0.0
    %478 = vmatpush1.msra.mxu0 %v429
    %479 = vmatprep.subr.mxu0 0.0
    %480 = vmatpush1.msra.mxu0 %v428
    %481 = vmatprep.subr.mxu0 0.0
    %482 = vmatpush1.msra.mxu0 %v427
    %483 = vmatprep.subr.mxu0 0.0
    %484 = vmatpush1.msra.mxu0 %v426
    %485 = vmatprep.subr.mxu0 0.0
    %486 = vmatpush1.msra.mxu0 %v425
    %487 = vmatprep.subr.mxu0 0.0
    %488 = vmatpush1.msra.mxu0 %v424
    %489 = vmatprep.subr.mxu0 0.0
    %490 = vmatpush1.msra.mxu0 %v423
    %491 = vmatprep.subr.mxu0 0.0
    %492 = vmatpush1.msra.mxu0 %v422
    %493 = vmatprep.subr.mxu0 0.0
    %494 = vmatpush2.msra.mxu0 %v453
    %495 = vmatprep.subr.mxu0 0.0
    %496 = vmatpush2.msra.mxu0 %v452
    %497 = vmatprep.subr.mxu0 0.0
    %498 = vmatpush2.msra.mxu0 %v451
    %499 = vmatprep.subr.mxu0 0.0
    %500 = vmatpush2.msra.mxu0 %v450
    %501 = vmatprep.subr.mxu0 0.0
    %502 = vmatpush2.msra.mxu0 %v449
    %503 = vmatprep.subr.mxu0 0.0
    %504 = vmatpush2.msra.mxu0 %v448
    %505 = vmatprep.subr.mxu0 0.0
    %506 = vmatpush2.msra.mxu0 %v447
    %507 = vmatprep.subr.mxu0 0.0
    %508 = vmatpush2.msra.mxu0 %v446
    %509 = vmatprep.subr.mxu0 0.0
    %510 = vmatpush2.msra.mxu0 %v445
    %511 = vmatprep.subr.mxu0 0.0
    %512 = vmatpush2.msra.mxu0 %v444
    %513 = vmatprep.subr.mxu0 0.0
    %514 = vmatpush2.msra.mxu0 %v443
    %515 = vmatprep.subr.mxu0 0.0
    %516 = vmatpush2.msra.mxu0 %v442
    %517 = vmatprep.subr.mxu0 0.0
    %518 = vmatpush2.msra.mxu0 %v441
    %519 = vmatprep.subr.mxu0 0.0
    %520 = vmatpush2.msra.mxu0 %v440
    %521 = vmatprep.subr.mxu0 0.0
    %522 = vmatpush2.msra.mxu0 %v439
    %523 = vmatprep.subr.mxu0 0.0
    %524 = vmatpush2.msra.mxu0 %v438
    %525 = vmatprep.mubr.f32.mxu0 %v421
    %526 = vmatmul.mubr.f32.gmra.mxu0 %v420
    %v527 = vpop.f32.mrf.mxu0
    %v528 = vadd.f32 %v459, %v527
    %v529 = vpop.f32.mrf.mxu0
    %530 = vdwg.mxu0
    %v531 = vlaneseq
    %v532 = vand.u32 %v531, 127
    %vm533 = vcmp.ge.s32.totalorder %v532, 4
    %v534 = vmax.f32 %v528, -20.0
    %v535 = vmin.f32 %v534, 2.0
    %v536 = vsel %vm533, %v535, %v528
    %v537 = vld [vmem:[%s10] sm:$0xff]
    %v538 = vld [vmem:[%s10 + $0x8] sm:$0xff]
    %v539 = vld [vmem:[%s10 + $0x10] sm:$0xff]
    %v540 = vld [vmem:[%s10 + $0x18] sm:$0xff]
    %v541 = vld [vmem:[%s10 + $0x20] sm:$0xff]
    %v542 = vld [vmem:[%s10 + $0x28] sm:$0xff]
    %v543 = vld [vmem:[%s10 + $0x30] sm:$0xff]
    %v544 = vld [vmem:[%s10 + $0x38] sm:$0xff]
    %v545 = vld [vmem:[%s10 + $0x40] sm:$0xff]
    %v546 = vld [vmem:[%s10 + $0x48] sm:$0xff]
    %v547 = vld [vmem:[%s10 + $0x50] sm:$0xff]
    %v548 = vld [vmem:[%s10 + $0x58] sm:$0xff]
    %v549 = vld [vmem:[%s10 + $0x60] sm:$0xff]
    %v550 = vld [vmem:[%s10 + $0x68] sm:$0xff]
    %v551 = vld [vmem:[%s10 + $0x70] sm:$0xff]
    %v552 = vld [vmem:[%s10 + $0x78] sm:$0xff]
    %v553 = vld [vmem:[%s1] sm:$0xff]
    %v554 = vld [vmem:[%s11] sm:$0xff]
    %v555 = vld [vmem:[%s11 + $0x8] sm:$0xff]
    %v558 = vcombine.high %v554, %v554
    %v559 = vcombine.high %v555, %v555
    %vm560 = vcmask 31744
    %v562 = vsel %vm560, %v553, 0
    %vm564 = vcmask 1043456
    %v565 = vsel %vm564, %v554, 0
    %v567 = vsel %vm564, %v558, 0
    %v569 = vsel %vm564, %v555, 0
    %v571 = vsel %vm564, %v559, 0
    %573 = vmatprep.subr.mxu0 0.0
    %574 = vmatpush1.msra.mxu0 0.0
    %575 = vmatprep.subr.mxu0 0.0
    %576 = vmatpush1.msra.mxu0 0.0
    %577 = vmatprep.subr.mxu0 0.0
    %578 = vmatpush1.msra.mxu0 0.0
    %579 = vmatprep.subr.mxu0 0.0
    %580 = vmatpush1.msra.mxu0 0.0
    %581 = vmatprep.subr.mxu0 0.0
    %582 = vmatpush1.msra.mxu0 0.0
    %583 = vmatprep.subr.mxu0 0.0
    %584 = vmatpush1.msra.mxu0 0.0
    %585 = vmatprep.subr.mxu0 0.0
    %586 = vmatpush1.msra.mxu0 0.0
    %587 = vmatprep.subr.mxu0 0.0
    %588 = vmatpush1.msra.mxu0 0.0
    %589 = vmatprep.subr.mxu0 0.0
    %590 = vmatpush1.msra.mxu0 0.0
    %591 = vmatprep.subr.mxu0 0.0
    %592 = vmatpush1.msra.mxu0 0.0
    %593 = vmatprep.subr.mxu0 0.0
    %594 = vmatpush1.msra.mxu0 0.0
    %595 = vmatprep.subr.mxu0 0.0
    %596 = vmatpush1.msra.mxu0 0.0
    %597 = vmatprep.subr.mxu0 0.0
    %598 = vmatpush1.msra.mxu0 0.0
    %599 = vmatprep.subr.mxu0 0.0
    %600 = vmatpush1.msra.mxu0 0.0
    %601 = vmatprep.subr.mxu0 0.0
    %602 = vmatpush1.msra.mxu0 0.0
    %603 = vmatprep.subr.mxu0 %v567
    %604 = vmatpush1.msra.mxu0 %v565
    %605 = vmatprep.subr.mxu0 0.0
    %606 = vmatpush2.msra.mxu0 0.0
    %607 = vmatprep.subr.mxu0 0.0
    %608 = vmatpush2.msra.mxu0 0.0
    %609 = vmatprep.subr.mxu0 0.0
    %610 = vmatpush2.msra.mxu0 0.0
    %611 = vmatprep.subr.mxu0 0.0
    %612 = vmatpush2.msra.mxu0 0.0
    %613 = vmatprep.subr.mxu0 0.0
    %614 = vmatpush2.msra.mxu0 0.0
    %615 = vmatprep.subr.mxu0 0.0
    %616 = vmatpush2.msra.mxu0 0.0
    %617 = vmatprep.subr.mxu0 0.0
    %618 = vmatpush2.msra.mxu0 0.0
    %619 = vmatprep.subr.mxu0 0.0
    %620 = vmatpush2.msra.mxu0 0.0
    %621 = vmatprep.subr.mxu0 0.0
    %622 = vmatpush2.msra.mxu0 0.0
    %623 = vmatprep.subr.mxu0 0.0
    %624 = vmatpush2.msra.mxu0 0.0
    %625 = vmatprep.subr.mxu0 0.0
    %626 = vmatpush2.msra.mxu0 0.0
    %627 = vmatprep.subr.mxu0 0.0
    %628 = vmatpush2.msra.mxu0 0.0
    %629 = vmatprep.subr.mxu0 0.0
    %630 = vmatpush2.msra.mxu0 0.0
    %631 = vmatprep.subr.mxu0 0.0
    %632 = vmatpush2.msra.mxu0 0.0
    %633 = vmatprep.subr.mxu0 0.0
    %634 = vmatpush2.msra.mxu0 0.0
    %635 = vmatprep.subr.mxu0 0.0
    %636 = vmatpush2.msra.mxu0 0.0
    %637 = vmatprep.mubr.f32.mxu0 0.0
    %638 = vmatmul.mubr.f32.gmra.mxu0 %v562
    %v639 = vpop.f32.mrf.mxu0
    %v640 = vadd.f32 0.0, %v639
    %v641 = vpop.f32.mrf.mxu0
    %v642 = vadd.f32 0.0, %v641
    %643 = vdwg.mxu0
    %644 = vmatprep.subr.mxu0 0.0
    %645 = vmatpush1.msra.mxu0 0.0
    %646 = vmatprep.subr.mxu0 0.0
    %647 = vmatpush1.msra.mxu0 0.0
    %648 = vmatprep.subr.mxu0 0.0
    %649 = vmatpush1.msra.mxu0 0.0
    %650 = vmatprep.subr.mxu0 0.0
    %651 = vmatpush1.msra.mxu0 0.0
    %652 = vmatprep.subr.mxu0 0.0
    %653 = vmatpush1.msra.mxu0 0.0
    %654 = vmatprep.subr.mxu0 0.0
    %655 = vmatpush1.msra.mxu0 0.0
    %656 = vmatprep.subr.mxu0 0.0
    %657 = vmatpush1.msra.mxu0 0.0
    %658 = vmatprep.subr.mxu0 0.0
    %659 = vmatpush1.msra.mxu0 0.0
    %660 = vmatprep.subr.mxu0 0.0
    %661 = vmatpush1.msra.mxu0 0.0
    %662 = vmatprep.subr.mxu0 0.0
    %663 = vmatpush1.msra.mxu0 0.0
    %664 = vmatprep.subr.mxu0 0.0
    %665 = vmatpush1.msra.mxu0 0.0
    %666 = vmatprep.subr.mxu0 0.0
    %667 = vmatpush1.msra.mxu0 0.0
    %668 = vmatprep.subr.mxu0 0.0
    %669 = vmatpush1.msra.mxu0 0.0
    %670 = vmatprep.subr.mxu0 0.0
    %671 = vmatpush1.msra.mxu0 0.0
    %672 = vmatprep.subr.mxu0 0.0
    %673 = vmatpush1.msra.mxu0 0.0
    %674 = vmatprep.subr.mxu0 %v571
    %675 = vmatpush1.msra.mxu0 %v569
    %676 = vmatprep.subr.mxu0 0.0
    %677 = vmatpush2.msra.mxu0 0.0
    %678 = vmatprep.subr.mxu0 0.0
    %679 = vmatpush2.msra.mxu0 0.0
    %680 = vmatprep.subr.mxu0 0.0
    %681 = vmatpush2.msra.mxu0 0.0
    %682 = vmatprep.subr.mxu0 0.0
    %683 = vmatpush2.msra.mxu0 0.0
    %684 = vmatprep.subr.mxu0 0.0
    %685 = vmatpush2.msra.mxu0 0.0
    %686 = vmatprep.subr.mxu0 0.0
    %687 = vmatpush2.msra.mxu0 0.0
    %688 = vmatprep.subr.mxu0 0.0
    %689 = vmatpush2.msra.mxu0 0.0
    %690 = vmatprep.subr.mxu0 0.0
    %691 = vmatpush2.msra.mxu0 0.0
    %692 = vmatprep.subr.mxu0 0.0
    %693 = vmatpush2.msra.mxu0 0.0
    %694 = vmatprep.subr.mxu0 0.0
    %695 = vmatpush2.msra.mxu0 0.0
    %696 = vmatprep.subr.mxu0 0.0
    %697 = vmatpush2.msra.mxu0 0.0
    %698 = vmatprep.subr.mxu0 0.0
    %699 = vmatpush2.msra.mxu0 0.0
    %700 = vmatprep.subr.mxu0 0.0
    %701 = vmatpush2.msra.mxu0 0.0
    %702 = vmatprep.subr.mxu0 0.0
    %703 = vmatpush2.msra.mxu0 0.0
    %704 = vmatprep.subr.mxu0 0.0
    %705 = vmatpush2.msra.mxu0 0.0
    %706 = vmatprep.subr.mxu0 0.0
    %707 = vmatpush2.msra.mxu0 0.0
    %708 = vmatprep.mubr.f32.mxu0 0.0
    %709 = vmatmul.mubr.f32.gmra.mxu0 %v562
    %v710 = vpop.f32.mrf.mxu0
    %v711 = vadd.f32 0.0, %v710
    %v712 = vpop.f32.mrf.mxu0
    %v713 = vadd.f32 0.0, %v712
    %714 = vdwg.mxu0
    %715 = vmatprep.subr.mxu0 0.0
    %716 = vmatpush1.msra.mxu0 0.0
    %717 = vmatprep.subr.mxu0 0.0
    %718 = vmatpush1.msra.mxu0 0.0
    %719 = vmatprep.subr.mxu0 0.0
    %720 = vmatpush1.msra.mxu0 0.0
    %721 = vmatprep.subr.mxu0 0.0
    %722 = vmatpush1.msra.mxu0 0.0
    %723 = vmatprep.subr.mxu0 0.0
    %724 = vmatpush1.msra.mxu0 0.0
    %725 = vmatprep.subr.mxu0 0.0
    %726 = vmatpush1.msra.mxu0 0.0
    %727 = vmatprep.subr.mxu0 0.0
    %728 = vmatpush1.msra.mxu0 0.0
    %729 = vmatprep.subr.mxu0 0.0
    %730 = vmatpush1.msra.mxu0 0.0
    %731 = vmatprep.subr.mxu0 0.0
    %732 = vmatpush1.msra.mxu0 0.0
    %733 = vmatprep.subr.mxu0 0.0
    %734 = vmatpush1.msra.mxu0 0.0
    %735 = vmatprep.subr.mxu0 0.0
    %736 = vmatpush1.msra.mxu0 0.0
    %737 = vmatprep.subr.mxu0 0.0
    %738 = vmatpush1.msra.mxu0 0.0
    %739 = vmatprep.subr.mxu0 %v550
    %740 = vmatpush1.msra.mxu0 %v549
    %741 = vmatprep.subr.mxu0 %v546
    %742 = vmatpush1.msra.mxu0 %v545
    %743 = vmatprep.subr.mxu0 %v542
    %744 = vmatpush1.msra.mxu0 %v541
    %745 = vmatprep.subr.mxu0 %v538
    %746 = vmatpush1.msra.mxu0 %v537
    %747 = vmatprep.subr.mxu0 0.0
    %748 = vmatpush2.msra.mxu0 0.0
    %749 = vmatprep.subr.mxu0 0.0
    %750 = vmatpush2.msra.mxu0 0.0
    %751 = vmatprep.subr.mxu0 0.0
    %752 = vmatpush2.msra.mxu0 0.0
    %753 = vmatprep.subr.mxu0 0.0
    %754 = vmatpush2.msra.mxu0 0.0
    %755 = vmatprep.subr.mxu0 0.0
    %756 = vmatpush2.msra.mxu0 0.0
    %757 = vmatprep.subr.mxu0 0.0
    %758 = vmatpush2.msra.mxu0 0.0
    %759 = vmatprep.subr.mxu0 0.0
    %760 = vmatpush2.msra.mxu0 0.0
    %761 = vmatprep.subr.mxu0 0.0
    %762 = vmatpush2.msra.mxu0 0.0
    %763 = vmatprep.subr.mxu0 0.0
    %764 = vmatpush2.msra.mxu0 0.0
    %765 = vmatprep.subr.mxu0 0.0
    %766 = vmatpush2.msra.mxu0 0.0
    %767 = vmatprep.subr.mxu0 0.0
    %768 = vmatpush2.msra.mxu0 0.0
    %769 = vmatprep.subr.mxu0 0.0
    %770 = vmatpush2.msra.mxu0 0.0
    %771 = vmatprep.subr.mxu0 0.0
    %772 = vmatpush2.msra.mxu0 0.0
    %773 = vmatprep.subr.mxu0 0.0
    %774 = vmatpush2.msra.mxu0 0.0
    %775 = vmatprep.subr.mxu0 0.0
    %776 = vmatpush2.msra.mxu0 0.0
    %777 = vmatprep.subr.mxu0 0.0
    %778 = vmatpush2.msra.mxu0 0.0
    %779 = vmatprep.mubr.f32.mxu0 0.0
    %780 = vmatmul.mubr.f32.gmra.mxu0 %v198
    %v781 = vpop.f32.mrf.mxu0
    %v782 = vadd.f32 %v640, %v781
    %v783 = vpop.f32.mrf.mxu0
    %v784 = vadd.f32 %v642, %v783
    %785 = vdwg.mxu0
    %786 = vmatprep.subr.mxu0 0.0
    %787 = vmatpush1.msra.mxu0 0.0
    %788 = vmatprep.subr.mxu0 0.0
    %789 = vmatpush1.msra.mxu0 0.0
    %790 = vmatprep.subr.mxu0 0.0
    %791 = vmatpush1.msra.mxu0 0.0
    %792 = vmatprep.subr.mxu0 0.0
    %793 = vmatpush1.msra.mxu0 0.0
    %794 = vmatprep.subr.mxu0 0.0
    %795 = vmatpush1.msra.mxu0 0.0
    %796 = vmatprep.subr.mxu0 0.0
    %797 = vmatpush1.msra.mxu0 0.0
    %798 = vmatprep.subr.mxu0 0.0
    %799 = vmatpush1.msra.mxu0 0.0
    %800 = vmatprep.subr.mxu0 0.0
    %801 = vmatpush1.msra.mxu0 0.0
    %802 = vmatprep.subr.mxu0 0.0
    %803 = vmatpush1.msra.mxu0 0.0
    %804 = vmatprep.subr.mxu0 0.0
    %805 = vmatpush1.msra.mxu0 0.0
    %806 = vmatprep.subr.mxu0 0.0
    %807 = vmatpush1.msra.mxu0 0.0
    %808 = vmatprep.subr.mxu0 0.0
    %809 = vmatpush1.msra.mxu0 0.0
    %810 = vmatprep.subr.mxu0 %v552
    %811 = vmatpush1.msra.mxu0 %v551
    %812 = vmatprep.subr.mxu0 %v548
    %813 = vmatpush1.msra.mxu0 %v547
    %814 = vmatprep.subr.mxu0 %v544
    %815 = vmatpush1.msra.mxu0 %v543
    %816 = vmatprep.subr.mxu0 %v540
    %817 = vmatpush1.msra.mxu0 %v539
    %818 = vmatprep.subr.mxu0 0.0
    %819 = vmatpush2.msra.mxu0 0.0
    %820 = vmatprep.subr.mxu0 0.0
    %821 = vmatpush2.msra.mxu0 0.0
    %822 = vmatprep.subr.mxu0 0.0
    %823 = vmatpush2.msra.mxu0 0.0
    %824 = vmatprep.subr.mxu0 0.0
    %825 = vmatpush2.msra.mxu0 0.0
    %826 = vmatprep.subr.mxu0 0.0
    %827 = vmatpush2.msra.mxu0 0.0
    %828 = vmatprep.subr.mxu0 0.0
    %829 = vmatpush2.msra.mxu0 0.0
    %830 = vmatprep.subr.mxu0 0.0
    %831 = vmatpush2.msra.mxu0 0.0
    %832 = vmatprep.subr.mxu0 0.0
    %833 = vmatpush2.msra.mxu0 0.0
    %834 = vmatprep.subr.mxu0 0.0
    %835 = vmatpush2.msra.mxu0 0.0
    %836 = vmatprep.subr.mxu0 0.0
    %837 = vmatpush2.msra.mxu0 0.0
    %838 = vmatprep.subr.mxu0 0.0
    %839 = vmatpush2.msra.mxu0 0.0
    %840 = vmatprep.subr.mxu0 0.0
    %841 = vmatpush2.msra.mxu0 0.0
    %842 = vmatprep.subr.mxu0 0.0
    %843 = vmatpush2.msra.mxu0 0.0
    %844 = vmatprep.subr.mxu0 0.0
    %845 = vmatpush2.msra.mxu0 0.0
    %846 = vmatprep.subr.mxu0 0.0
    %847 = vmatpush2.msra.mxu0 0.0
    %848 = vmatprep.subr.mxu0 0.0
    %849 = vmatpush2.msra.mxu0 0.0
    %850 = vmatprep.mubr.f32.mxu0 0.0
    %851 = vmatmul.mubr.f32.gmra.mxu0 %v198
    %v852 = vpop.f32.mrf.mxu0
    %v853 = vadd.f32 %v711, %v852
    %v854 = vpop.f32.mrf.mxu0
    %v855 = vadd.f32 %v713, %v854
    %856 = vdwg.mxu0
    %v857 = vld [vmem:[%s12] sm:$0xf]
    %v859 = vlaneseq
    %v860 = vshrl.u32 %v859, 7
    %v861 = vsub.s32 0, %v860
    %v862 = vrot.slane %v857, %v861
    %v863 = vlaneseq
    %v864 = vshrl.u32 %v863, 7
    %v865 = vsub.s32 1, %v864
    %v866 = vrot.slane %v857, %v865
    %v867 = vlaneseq
    %v868 = vshrl.u32 %v867, 7
    %v869 = vsub.s32 2, %v868
    %v870 = vrot.slane %v857, %v869
    %v871 = vlaneseq
    %v872 = vshrl.u32 %v871, 7
    %v873 = vsub.s32 3, %v872
    %v874 = vrot.slane %v857, %v873
    %v879 = vadd.f32 %v782, %v862
    %v880 = vadd.f32 %v784, %v866
    %v881 = vadd.f32 %v853, %v870
    %v882 = vadd.f32 %v855, %v874
    %v883 = vmax.f32 %v879, 0.0
    %v884 = vmax.f32 %v880, 0.0
    %v885 = vmax.f32 %v881, 0.0
    %v886 = vmax.f32 %v882, 0.0
    %v887 = vld [vmem:[#allocation2] sm:$0xff]
    %v888 = vld [vmem:[#allocation2 + $0x8] sm:$0xff]
    %v889 = vld [vmem:[#allocation2 + $0x10] sm:$0xff]
    %v890 = vld [vmem:[#allocation2 + $0x18] sm:$0xff]
    %v891 = vld [vmem:[#allocation2 + $0x20] sm:$0xff]
    %v892 = vld [vmem:[#allocation2 + $0x28] sm:$0xff]
    %v893 = vld [vmem:[#allocation2 + $0x30] sm:$0xff]
    %v894 = vld [vmem:[#allocation2 + $0x38] sm:$0xff]
    %v895 = vld [vmem:[#allocation2 + $0x40] sm:$0xff]
    %v896 = vld [vmem:[#allocation2 + $0x48] sm:$0xff]
    %v897 = vld [vmem:[#allocation2 + $0x50] sm:$0xff]
    %v898 = vld [vmem:[#allocation2 + $0x58] sm:$0xff]
    %v899 = vld [vmem:[#allocation2 + $0x60] sm:$0xff]
    %v900 = vld [vmem:[#allocation2 + $0x68] sm:$0xff]
    %v901 = vld [vmem:[#allocation2 + $0x70] sm:$0xff]
    %v902 = vld [vmem:[#allocation2 + $0x78] sm:$0xff]
    %v903 = vld [vmem:[#allocation2 + $0x80] sm:$0xff]
    %v904 = vld [vmem:[#allocation2 + $0x88] sm:$0xff]
    %v905 = vld [vmem:[#allocation2 + $0x90] sm:$0xff]
    %v906 = vld [vmem:[#allocation2 + $0x98] sm:$0xff]
    %v907 = vld [vmem:[#allocation2 + $0xa0] sm:$0xff]
    %v908 = vld [vmem:[#allocation2 + $0xa8] sm:$0xff]
    %v909 = vld [vmem:[#allocation2 + $0xb0] sm:$0xff]
    %v910 = vld [vmem:[#allocation2 + $0xb8] sm:$0xff]
    %v911 = vld [vmem:[#allocation2 + $0xc0] sm:$0xff]
    %v912 = vld [vmem:[#allocation2 + $0xc8] sm:$0xff]
    %v913 = vld [vmem:[#allocation2 + $0xd0] sm:$0xff]
    %v914 = vld [vmem:[#allocation2 + $0xd8] sm:$0xff]
    %v915 = vld [vmem:[#allocation2 + $0xe0] sm:$0xff]
    %v916 = vld [vmem:[#allocation2 + $0xe8] sm:$0xff]
    %v917 = vld [vmem:[#allocation2 + $0xf0] sm:$0xff]
    %v918 = vld [vmem:[#allocation2 + $0xf8] sm:$0xff]
    %v919 = vld [vmem:[#allocation2 + $0x100] sm:$0xff]
    %v920 = vld [vmem:[#allocation2 + $0x108] sm:$0xff]
    %v921 = vld [vmem:[#allocation2 + $0x110] sm:$0xff]
    %v922 = vld [vmem:[#allocation2 + $0x118] sm:$0xff]
    %v923 = vld [vmem:[#allocation2 + $0x120] sm:$0xff]
    %v924 = vld [vmem:[#allocation2 + $0x128] sm:$0xff]
    %v925 = vld [vmem:[#allocation2 + $0x130] sm:$0xff]
    %v926 = vld [vmem:[#allocation2 + $0x138] sm:$0xff]
    %v927 = vld [vmem:[#allocation2 + $0x140] sm:$0xff]
    %v928 = vld [vmem:[#allocation2 + $0x148] sm:$0xff]
    %v929 = vld [vmem:[#allocation2 + $0x150] sm:$0xff]
    %v930 = vld [vmem:[#allocation2 + $0x158] sm:$0xff]
    %v931 = vld [vmem:[#allocation2 + $0x160] sm:$0xff]
    %v932 = vld [vmem:[#allocation2 + $0x168] sm:$0xff]
    %v933 = vld [vmem:[#allocation2 + $0x170] sm:$0xff]
    %v934 = vld [vmem:[#allocation2 + $0x178] sm:$0xff]
    %v935 = vld [vmem:[#allocation2 + $0x180] sm:$0xff]
    %v936 = vld [vmem:[#allocation2 + $0x188] sm:$0xff]
    %v937 = vld [vmem:[#allocation2 + $0x190] sm:$0xff]
    %v938 = vld [vmem:[#allocation2 + $0x198] sm:$0xff]
    %v939 = vld [vmem:[#allocation2 + $0x1a0] sm:$0xff]
    %v940 = vld [vmem:[#allocation2 + $0x1a8] sm:$0xff]
    %v941 = vld [vmem:[#allocation2 + $0x1b0] sm:$0xff]
    %v942 = vld [vmem:[#allocation2 + $0x1b8] sm:$0xff]
    %v943 = vld [vmem:[#allocation2 + $0x1c0] sm:$0xff]
    %v944 = vld [vmem:[#allocation2 + $0x1c8] sm:$0xff]
    %v945 = vld [vmem:[#allocation2 + $0x1d0] sm:$0xff]
    %v946 = vld [vmem:[#allocation2 + $0x1d8] sm:$0xff]
    %v947 = vld [vmem:[#allocation2 + $0x1e0] sm:$0xff]
    %v948 = vld [vmem:[#allocation2 + $0x1e8] sm:$0xff]
    %v949 = vld [vmem:[#allocation2 + $0x1f0] sm:$0xff]
    %v950 = vld [vmem:[#allocation2 + $0x1f8] sm:$0xff]
    %v951 = vld [vmem:[%s14] sm:$0x3]
    %v953 = vlaneseq
    %v954 = vshrl.u32 %v953, 7
    %v955 = vsub.s32 0, %v954
    %v956 = vrot.slane %v951, %v955
    %v957 = vlaneseq
    %v958 = vshrl.u32 %v957, 7
    %v959 = vsub.s32 1, %v958
    %v960 = vrot.slane %v951, %v959
    %963 = vmatprep.subr.mxu0 %v918
    %964 = vmatpush1.msra.mxu0 %v917
    %965 = vmatprep.subr.mxu0 %v916
    %966 = vmatpush1.msra.mxu0 %v915
    %967 = vmatprep.subr.mxu0 %v914
    %968 = vmatpush1.msra.mxu0 %v913
    %969 = vmatprep.subr.mxu0 %v912
    %970 = vmatpush1.msra.mxu0 %v911
    %971 = vmatprep.subr.mxu0 %v910
    %972 = vmatpush1.msra.mxu0 %v909
    %973 = vmatprep.subr.mxu0 %v908
    %974 = vmatpush1.msra.mxu0 %v907
    %975 = vmatprep.subr.mxu0 %v906
    %976 = vmatpush1.msra.mxu0 %v905
    %977 = vmatprep.subr.mxu0 %v904
    %978 = vmatpush1.msra.mxu0 %v903
    %979 = vmatprep.subr.mxu0 %v902
    %980 = vmatpush1.msra.mxu0 %v901
    %981 = vmatprep.subr.mxu0 %v900
    %982 = vmatpush1.msra.mxu0 %v899
    %983 = vmatprep.subr.mxu0 %v898
    %984 = vmatpush1.msra.mxu0 %v897
    %985 = vmatprep.subr.mxu0 %v896
    %986 = vmatpush1.msra.mxu0 %v895
    %987 = vmatprep.subr.mxu0 %v894
    %988 = vmatpush1.msra.mxu0 %v893
    %989 = vmatprep.subr.mxu0 %v892
    %990 = vmatpush1.msra.mxu0 %v891
    %991 = vmatprep.subr.mxu0 %v890
    %992 = vmatpush1.msra.mxu0 %v889
    %993 = vmatprep.subr.mxu0 %v888
    %994 = vmatpush1.msra.mxu0 %v887
    %995 = vmatprep.subr.mxu0 %v950
    %996 = vmatpush2.msra.mxu0 %v949
    %997 = vmatprep.subr.mxu0 %v948
    %998 = vmatpush2.msra.mxu0 %v947
    %999 = vmatprep.subr.mxu0 %v946
    %1000 = vmatpush2.msra.mxu0 %v945
    %1001 = vmatprep.subr.mxu0 %v944
    %1002 = vmatpush2.msra.mxu0 %v943
    %1003 = vmatprep.subr.mxu0 %v942
    %1004 = vmatpush2.msra.mxu0 %v941
    %1005 = vmatprep.subr.mxu0 %v940
    %1006 = vmatpush2.msra.mxu0 %v939
    %1007 = vmatprep.subr.mxu0 %v938
    %1008 = vmatpush2.msra.mxu0 %v937
    %1009 = vmatprep.subr.mxu0 %v936
    %1010 = vmatpush2.msra.mxu0 %v935
    %1011 = vmatprep.subr.mxu0 %v934
    %1012 = vmatpush2.msra.mxu0 %v933
    %1013 = vmatprep.subr.mxu0 %v932
    %1014 = vmatpush2.msra.mxu0 %v931
    %1015 = vmatprep.subr.mxu0 %v930
    %1016 = vmatpush2.msra.mxu0 %v929
    %1017 = vmatprep.subr.mxu0 %v928
    %1018 = vmatpush2.msra.mxu0 %v927
    %1019 = vmatprep.subr.mxu0 %v926
    %1020 = vmatpush2.msra.mxu0 %v925
    %1021 = vmatprep.subr.mxu0 %v924
    %1022 = vmatpush2.msra.mxu0 %v923
    %1023 = vmatprep.subr.mxu0 %v922
    %1024 = vmatpush2.msra.mxu0 %v921
    %1025 = vmatprep.subr.mxu0 %v920
    %1026 = vmatpush2.msra.mxu0 %v919
    %1027 = vmatprep.mubr.f32.mxu0 %v884
    %1028 = vmatmul.mubr.f32.gmra.mxu0 %v883
    %v1029 = vpop.f32.mrf.mxu0
    %v1030 = vadd.f32 %v956, %v1029
    %v1031 = vpop.f32.mrf.mxu0
    %v1032 = vadd.f32 %v960, %v1031
    %1033 = vdwg.mxu0
    %v1034 = vmax.f32 %v1030, 0.0
    %v1035 = vmax.f32 %v1032, 0.0
    %v1036 = vld [vmem:[#allocation5] sm:$0xff]
    %v1037 = vld [vmem:[#allocation5 + $0x8] sm:$0xff]
    %v1038 = vld [vmem:[#allocation5 + $0x10] sm:$0xff]
    %v1039 = vld [vmem:[#allocation5 + $0x18] sm:$0xff]
    %v1040 = vld [vmem:[#allocation5 + $0x20] sm:$0xff]
    %v1041 = vld [vmem:[#allocation5 + $0x28] sm:$0xff]
    %v1042 = vld [vmem:[#allocation5 + $0x30] sm:$0xff]
    %v1043 = vld [vmem:[#allocation5 + $0x38] sm:$0xff]
    %v1044 = vld [vmem:[#allocation5 + $0x40] sm:$0xff]
    %v1045 = vld [vmem:[#allocation5 + $0x48] sm:$0xff]
    %v1046 = vld [vmem:[#allocation5 + $0x50] sm:$0xff]
    %v1047 = vld [vmem:[#allocation5 + $0x58] sm:$0xff]
    %v1048 = vld [vmem:[#allocation5 + $0x60] sm:$0xff]
    %v1049 = vld [vmem:[#allocation5 + $0x68] sm:$0xff]
    %v1050 = vld [vmem:[#allocation5 + $0x70] sm:$0xff]
    %v1051 = vld [vmem:[#allocation5 + $0x78] sm:$0xff]
    %v1052 = vld [vmem:[#allocation5 + $0x80] sm:$0xff]
    %v1053 = vld [vmem:[#allocation5 + $0x88] sm:$0xff]
    %v1054 = vld [vmem:[#allocation5 + $0x90] sm:$0xff]
    %v1055 = vld [vmem:[#allocation5 + $0x98] sm:$0xff]
    %v1056 = vld [vmem:[#allocation5 + $0xa0] sm:$0xff]
    %v1057 = vld [vmem:[#allocation5 + $0xa8] sm:$0xff]
    %v1058 = vld [vmem:[#allocation5 + $0xb0] sm:$0xff]
    %v1059 = vld [vmem:[#allocation5 + $0xb8] sm:$0xff]
    %v1060 = vld [vmem:[#allocation5 + $0xc0] sm:$0xff]
    %v1061 = vld [vmem:[#allocation5 + $0xc8] sm:$0xff]
    %v1062 = vld [vmem:[#allocation5 + $0xd0] sm:$0xff]
    %v1063 = vld [vmem:[#allocation5 + $0xd8] sm:$0xff]
    %v1064 = vld [vmem:[#allocation5 + $0xe0] sm:$0xff]
    %v1065 = vld [vmem:[#allocation5 + $0xe8] sm:$0xff]
    %v1066 = vld [vmem:[#allocation5 + $0xf0] sm:$0xff]
    %v1067 = vld [vmem:[#allocation5 + $0xf8] sm:$0xff]
    %v1068 = vld [vmem:[#allocation5 + $0x100] sm:$0xff]
    %v1069 = vld [vmem:[#allocation5 + $0x108] sm:$0xff]
    %v1070 = vld [vmem:[#allocation5 + $0x110] sm:$0xff]
    %v1071 = vld [vmem:[#allocation5 + $0x118] sm:$0xff]
    %v1072 = vld [vmem:[#allocation5 + $0x120] sm:$0xff]
    %v1073 = vld [vmem:[#allocation5 + $0x128] sm:$0xff]
    %v1074 = vld [vmem:[#allocation5 + $0x130] sm:$0xff]
    %v1075 = vld [vmem:[#allocation5 + $0x138] sm:$0xff]
    %v1076 = vld [vmem:[#allocation5 + $0x140] sm:$0xff]
    %v1077 = vld [vmem:[#allocation5 + $0x148] sm:$0xff]
    %v1078 = vld [vmem:[#allocation5 + $0x150] sm:$0xff]
    %v1079 = vld [vmem:[#allocation5 + $0x158] sm:$0xff]
    %v1080 = vld [vmem:[#allocation5 + $0x160] sm:$0xff]
    %v1081 = vld [vmem:[#allocation5 + $0x168] sm:$0xff]
    %v1082 = vld [vmem:[#allocation5 + $0x170] sm:$0xff]
    %v1083 = vld [vmem:[#allocation5 + $0x178] sm:$0xff]
    %v1084 = vld [vmem:[#allocation5 + $0x180] sm:$0xff]
    %v1085 = vld [vmem:[#allocation5 + $0x188] sm:$0xff]
    %v1086 = vld [vmem:[#allocation5 + $0x190] sm:$0xff]
    %v1087 = vld [vmem:[#allocation5 + $0x198] sm:$0xff]
    %v1088 = vld [vmem:[#allocation5 + $0x1a0] sm:$0xff]
    %v1089 = vld [vmem:[#allocation5 + $0x1a8] sm:$0xff]
    %v1090 = vld [vmem:[#allocation5 + $0x1b0] sm:$0xff]
    %v1091 = vld [vmem:[#allocation5 + $0x1b8] sm:$0xff]
    %v1092 = vld [vmem:[#allocation5 + $0x1c0] sm:$0xff]
    %v1093 = vld [vmem:[#allocation5 + $0x1c8] sm:$0xff]
    %v1094 = vld [vmem:[#allocation5 + $0x1d0] sm:$0xff]
    %v1095 = vld [vmem:[#allocation5 + $0x1d8] sm:$0xff]
    %v1096 = vld [vmem:[#allocation5 + $0x1e0] sm:$0xff]
    %v1097 = vld [vmem:[#allocation5 + $0x1e8] sm:$0xff]
    %v1098 = vld [vmem:[#allocation5 + $0x1f0] sm:$0xff]
    %v1099 = vld [vmem:[#allocation5 + $0x1f8] sm:$0xff]
    %v1100 = vld [vmem:[%s16] sm:$0x3]
    %v1102 = vlaneseq
    %v1103 = vshrl.u32 %v1102, 7
    %v1104 = vsub.s32 0, %v1103
    %v1105 = vrot.slane %v1100, %v1104
    %v1106 = vlaneseq
    %v1107 = vshrl.u32 %v1106, 7
    %v1108 = vsub.s32 1, %v1107
    %v1109 = vrot.slane %v1100, %v1108
    %1112 = vmatprep.subr.mxu0 %v1067
    %1113 = vmatpush1.msra.mxu0 %v1066
    %1114 = vmatprep.subr.mxu0 %v1065
    %1115 = vmatpush1.msra.mxu0 %v1064
    %1116 = vmatprep.subr.mxu0 %v1063
    %1117 = vmatpush1.msra.mxu0 %v1062
    %1118 = vmatprep.subr.mxu0 %v1061
    %1119 = vmatpush1.msra.mxu0 %v1060
    %1120 = vmatprep.subr.mxu0 %v1059
    %1121 = vmatpush1.msra.mxu0 %v1058
    %1122 = vmatprep.subr.mxu0 %v1057
    %1123 = vmatpush1.msra.mxu0 %v1056
    %1124 = vmatprep.subr.mxu0 %v1055
    %1125 = vmatpush1.msra.mxu0 %v1054
    %1126 = vmatprep.subr.mxu0 %v1053
    %1127 = vmatpush1.msra.mxu0 %v1052
    %1128 = vmatprep.subr.mxu0 %v1051
    %1129 = vmatpush1.msra.mxu0 %v1050
    %1130 = vmatprep.subr.mxu0 %v1049
    %1131 = vmatpush1.msra.mxu0 %v1048
    %1132 = vmatprep.subr.mxu0 %v1047
    %1133 = vmatpush1.msra.mxu0 %v1046
    %1134 = vmatprep.subr.mxu0 %v1045
    %1135 = vmatpush1.msra.mxu0 %v1044
    %1136 = vmatprep.subr.mxu0 %v1043
    %1137 = vmatpush1.msra.mxu0 %v1042
    %1138 = vmatprep.subr.mxu0 %v1041
    %1139 = vmatpush1.msra.mxu0 %v1040
    %1140 = vmatprep.subr.mxu0 %v1039
    %1141 = vmatpush1.msra.mxu0 %v1038
    %1142 = vmatprep.subr.mxu0 %v1037
    %1143 = vmatpush1.msra.mxu0 %v1036
    %1144 = vmatprep.subr.mxu0 %v1099
    %1145 = vmatpush2.msra.mxu0 %v1098
    %1146 = vmatprep.subr.mxu0 %v1097
    %1147 = vmatpush2.msra.mxu0 %v1096
    %1148 = vmatprep.subr.mxu0 %v1095
    %1149 = vmatpush2.msra.mxu0 %v1094
    %1150 = vmatprep.subr.mxu0 %v1093
    %1151 = vmatpush2.msra.mxu0 %v1092
    %1152 = vmatprep.subr.mxu0 %v1091
    %1153 = vmatpush2.msra.mxu0 %v1090
    %1154 = vmatprep.subr.mxu0 %v1089
    %1155 = vmatpush2.msra.mxu0 %v1088
    %1156 = vmatprep.subr.mxu0 %v1087
    %1157 = vmatpush2.msra.mxu0 %v1086
    %1158 = vmatprep.subr.mxu0 %v1085
    %1159 = vmatpush2.msra.mxu0 %v1084
    %1160 = vmatprep.subr.mxu0 %v1083
    %1161 = vmatpush2.msra.mxu0 %v1082
    %1162 = vmatprep.subr.mxu0 %v1081
    %1163 = vmatpush2.msra.mxu0 %v1080
    %1164 = vmatprep.subr.mxu0 %v1079
    %1165 = vmatpush2.msra.mxu0 %v1078
    %1166 = vmatprep.subr.mxu0 %v1077
    %1167 = vmatpush2.msra.mxu0 %v1076
    %1168 = vmatprep.subr.mxu0 %v1075
    %1169 = vmatpush2.msra.mxu0 %v1074
    %1170 = vmatprep.subr.mxu0 %v1073
    %1171 = vmatpush2.msra.mxu0 %v1072
    %1172 = vmatprep.subr.mxu0 %v1071
    %1173 = vmatpush2.msra.mxu0 %v1070
    %1174 = vmatprep.subr.mxu0 %v1069
    %1175 = vmatpush2.msra.mxu0 %v1068
    %1176 = vmatprep.mubr.f32.mxu0 %v886
    %1177 = vmatmul.mubr.f32.gmra.mxu0 %v885
    %v1178 = vpop.f32.mrf.mxu0
    %v1179 = vadd.f32 %v1105, %v1178
    %v1180 = vpop.f32.mrf.mxu0
    %v1181 = vadd.f32 %v1109, %v1180
    %1182 = vdwg.mxu0
    %v1183 = vmax.f32 %v1179, 0.0
    %v1184 = vmax.f32 %v1181, 0.0
    %v1185 = vld [vmem:[%s17] sm:$0xff]
    %v1186 = vld [vmem:[%s17 + $0x8] sm:$0xff]
    %v1187 = vld [vmem:[%s17 + $0x10] sm:$0xff]
    %v1188 = vld [vmem:[%s17 + $0x18] sm:$0xff]
    %v1189 = vld [vmem:[%s17 + $0x20] sm:$0xff]
    %v1190 = vld [vmem:[%s17 + $0x28] sm:$0xff]
    %v1191 = vld [vmem:[%s17 + $0x30] sm:$0xff]
    %v1192 = vld [vmem:[%s17 + $0x38] sm:$0xff]
    %v1193 = vld [vmem:[%s17 + $0x40] sm:$0xff]
    %v1194 = vld [vmem:[%s17 + $0x48] sm:$0xff]
    %v1195 = vld [vmem:[%s17 + $0x50] sm:$0xff]
    %v1196 = vld [vmem:[%s17 + $0x58] sm:$0xff]
    %v1197 = vld [vmem:[%s17 + $0x60] sm:$0xff]
    %v1198 = vld [vmem:[%s17 + $0x68] sm:$0xff]
    %v1199 = vld [vmem:[%s17 + $0x70] sm:$0xff]
    %v1200 = vld [vmem:[%s17 + $0x78] sm:$0xff]
    %v1201 = vld [vmem:[%s17 + $0x80] sm:$0xff]
    %v1202 = vld [vmem:[%s17 + $0x88] sm:$0xff]
    %v1203 = vld [vmem:[%s17 + $0x90] sm:$0xff]
    %v1204 = vld [vmem:[%s17 + $0x98] sm:$0xff]
    %v1205 = vld [vmem:[%s17 + $0xa0] sm:$0xff]
    %v1206 = vld [vmem:[%s17 + $0xa8] sm:$0xff]
    %v1207 = vld [vmem:[%s17 + $0xb0] sm:$0xff]
    %v1208 = vld [vmem:[%s17 + $0xb8] sm:$0xff]
    %v1209 = vld [vmem:[%s17 + $0xc0] sm:$0xff]
    %v1210 = vld [vmem:[%s17 + $0xc8] sm:$0xff]
    %v1211 = vld [vmem:[%s17 + $0xd0] sm:$0xff]
    %v1212 = vld [vmem:[%s17 + $0xd8] sm:$0xff]
    %v1213 = vld [vmem:[%s17 + $0xe0] sm:$0xff]
    %v1214 = vld [vmem:[%s17 + $0xe8] sm:$0xff]
    %v1215 = vld [vmem:[%s17 + $0xf0] sm:$0xff]
    %v1216 = vld [vmem:[%s17 + $0xf8] sm:$0xff]
    %v1217 = vld [vmem:[%s17 + $0x100] sm:$0xff]
    %v1218 = vld [vmem:[%s17 + $0x108] sm:$0xff]
    %v1219 = vld [vmem:[%s17 + $0x110] sm:$0xff]
    %v1220 = vld [vmem:[%s17 + $0x118] sm:$0xff]
    %v1221 = vld [vmem:[%s17 + $0x120] sm:$0xff]
    %v1222 = vld [vmem:[%s17 + $0x128] sm:$0xff]
    %v1223 = vld [vmem:[%s17 + $0x130] sm:$0xff]
    %v1224 = vld [vmem:[%s17 + $0x138] sm:$0xff]
    %v1225 = vld [vmem:[%s17 + $0x140] sm:$0xff]
    %v1226 = vld [vmem:[%s17 + $0x148] sm:$0xff]
    %v1227 = vld [vmem:[%s17 + $0x150] sm:$0xff]
    %v1228 = vld [vmem:[%s17 + $0x158] sm:$0xff]
    %v1229 = vld [vmem:[%s17 + $0x160] sm:$0xff]
    %v1230 = vld [vmem:[%s17 + $0x168] sm:$0xff]
    %v1231 = vld [vmem:[%s17 + $0x170] sm:$0xff]
    %v1232 = vld [vmem:[%s17 + $0x178] sm:$0xff]
    %v1233 = vld [vmem:[%s17 + $0x180] sm:$0xff]
    %v1234 = vld [vmem:[%s17 + $0x188] sm:$0xff]
    %v1235 = vld [vmem:[%s17 + $0x190] sm:$0xff]
    %v1236 = vld [vmem:[%s17 + $0x198] sm:$0xff]
    %v1237 = vld [vmem:[%s17 + $0x1a0] sm:$0xff]
    %v1238 = vld [vmem:[%s17 + $0x1a8] sm:$0xff]
    %v1239 = vld [vmem:[%s17 + $0x1b0] sm:$0xff]
    %v1240 = vld [vmem:[%s17 + $0x1b8] sm:$0xff]
    %v1241 = vld [vmem:[%s17 + $0x1c0] sm:$0xff]
    %v1242 = vld [vmem:[%s17 + $0x1c8] sm:$0xff]
    %v1243 = vld [vmem:[%s17 + $0x1d0] sm:$0xff]
    %v1244 = vld [vmem:[%s17 + $0x1d8] sm:$0xff]
    %v1245 = vld [vmem:[%s17 + $0x1e0] sm:$0xff]
    %v1246 = vld [vmem:[%s17 + $0x1e8] sm:$0xff]
    %v1247 = vld [vmem:[%s17 + $0x1f0] sm:$0xff]
    %v1248 = vld [vmem:[%s17 + $0x1f8] sm:$0xff]
    %v1249 = vld [vmem:[%s18] sm:$0x1]
    %v1251 = vlaneseq
    %v1252 = vshrl.u32 %v1251, 7
    %v1253 = vsub.s32 0, %v1252
    %v1254 = vrot.slane %v1249, %v1253
    %1256 = vmatprep.subr.mxu0 0.0
    %1257 = vmatpush1.msra.mxu0 %v1200
    %1258 = vmatprep.subr.mxu0 0.0
    %1259 = vmatpush1.msra.mxu0 %v1199
    %1260 = vmatprep.subr.mxu0 0.0
    %1261 = vmatpush1.msra.mxu0 %v1198
    %1262 = vmatprep.subr.mxu0 0.0
    %1263 = vmatpush1.msra.mxu0 %v1197
    %1264 = vmatprep.subr.mxu0 0.0
    %1265 = vmatpush1.msra.mxu0 %v1196
    %1266 = vmatprep.subr.mxu0 0.0
    %1267 = vmatpush1.msra.mxu0 %v1195
    %1268 = vmatprep.subr.mxu0 0.0
    %1269 = vmatpush1.msra.mxu0 %v1194
    %1270 = vmatprep.subr.mxu0 0.0
    %1271 = vmatpush1.msra.mxu0 %v1193
    %1272 = vmatprep.subr.mxu0 0.0
    %1273 = vmatpush1.msra.mxu0 %v1192
    %1274 = vmatprep.subr.mxu0 0.0
    %1275 = vmatpush1.msra.mxu0 %v1191
    %1276 = vmatprep.subr.mxu0 0.0
    %1277 = vmatpush1.msra.mxu0 %v1190
    %1278 = vmatprep.subr.mxu0 0.0
    %1279 = vmatpush1.msra.mxu0 %v1189
    %1280 = vmatprep.subr.mxu0 0.0
    %1281 = vmatpush1.msra.mxu0 %v1188
    %1282 = vmatprep.subr.mxu0 0.0
    %1283 = vmatpush1.msra.mxu0 %v1187
    %1284 = vmatprep.subr.mxu0 0.0
    %1285 = vmatpush1.msra.mxu0 %v1186
    %1286 = vmatprep.subr.mxu0 0.0
    %1287 = vmatpush1.msra.mxu0 %v1185
    %1288 = vmatprep.subr.mxu0 0.0
    %1289 = vmatpush2.msra.mxu0 %v1216
    %1290 = vmatprep.subr.mxu0 0.0
    %1291 = vmatpush2.msra.mxu0 %v1215
    %1292 = vmatprep.subr.mxu0 0.0
    %1293 = vmatpush2.msra.mxu0 %v1214
    %1294 = vmatprep.subr.mxu0 0.0
    %1295 = vmatpush2.msra.mxu0 %v1213
    %1296 = vmatprep.subr.mxu0 0.0
    %1297 = vmatpush2.msra.mxu0 %v1212
    %1298 = vmatprep.subr.mxu0 0.0
    %1299 = vmatpush2.msra.mxu0 %v1211
    %1300 = vmatprep.subr.mxu0 0.0
    %1301 = vmatpush2.msra.mxu0 %v1210
    %1302 = vmatprep.subr.mxu0 0.0
    %1303 = vmatpush2.msra.mxu0 %v1209
    %1304 = vmatprep.subr.mxu0 0.0
    %1305 = vmatpush2.msra.mxu0 %v1208
    %1306 = vmatprep.subr.mxu0 0.0
    %1307 = vmatpush2.msra.mxu0 %v1207
    %1308 = vmatprep.subr.mxu0 0.0
    %1309 = vmatpush2.msra.mxu0 %v1206
    %1310 = vmatprep.subr.mxu0 0.0
    %1311 = vmatpush2.msra.mxu0 %v1205
    %1312 = vmatprep.subr.mxu0 0.0
    %1313 = vmatpush2.msra.mxu0 %v1204
    %1314 = vmatprep.subr.mxu0 0.0
    %1315 = vmatpush2.msra.mxu0 %v1203
    %1316 = vmatprep.subr.mxu0 0.0
    %1317 = vmatpush2.msra.mxu0 %v1202
    %1318 = vmatprep.subr.mxu0 0.0
    %1319 = vmatpush2.msra.mxu0 %v1201
    %1320 = vmatprep.mubr.f32.mxu0 %v1035
    %1321 = vmatmul.mubr.f32.gmra.mxu0 %v1034
    %v1322 = vpop.f32.mrf.mxu0
    %v1323 = vadd.f32 %v1254, %v1322
    %v1324 = vpop.f32.mrf.mxu0
    %1325 = vdwg.mxu0
    %1326 = vmatprep.subr.mxu0 0.0
    %1327 = vmatpush1.msra.mxu0 %v1232
    %1328 = vmatprep.subr.mxu0 0.0
    %1329 = vmatpush1.msra.mxu0 %v1231
    %1330 = vmatprep.subr.mxu0 0.0
    %1331 = vmatpush1.msra.mxu0 %v1230
    %1332 = vmatprep.subr.mxu0 0.0
    %1333 = vmatpush1.msra.mxu0 %v1229
    %1334 = vmatprep.subr.mxu0 0.0
    %1335 = vmatpush1.msra.mxu0 %v1228
    %1336 = vmatprep.subr.mxu0 0.0
    %1337 = vmatpush1.msra.mxu0 %v1227
    %1338 = vmatprep.subr.mxu0 0.0
    %1339 = vmatpush1.msra.mxu0 %v1226
    %1340 = vmatprep.subr.mxu0 0.0
    %1341 = vmatpush1.msra.mxu0 %v1225
    %1342 = vmatprep.subr.mxu0 0.0
    %1343 = vmatpush1.msra.mxu0 %v1224
    %1344 = vmatprep.subr.mxu0 0.0
    %1345 = vmatpush1.msra.mxu0 %v1223
    %1346 = vmatprep.subr.mxu0 0.0
    %1347 = vmatpush1.msra.mxu0 %v1222
    %1348 = vmatprep.subr.mxu0 0.0
    %1349 = vmatpush1.msra.mxu0 %v1221
    %1350 = vmatprep.subr.mxu0 0.0
    %1351 = vmatpush1.msra.mxu0 %v1220
    %1352 = vmatprep.subr.mxu0 0.0
    %1353 = vmatpush1.msra.mxu0 %v1219
    %1354 = vmatprep.subr.mxu0 0.0
    %1355 = vmatpush1.msra.mxu0 %v1218
    %1356 = vmatprep.subr.mxu0 0.0
    %1357 = vmatpush1.msra.mxu0 %v1217
    %1358 = vmatprep.subr.mxu0 0.0
    %1359 = vmatpush2.msra.mxu0 %v1248
    %1360 = vmatprep.subr.mxu0 0.0
    %1361 = vmatpush2.msra.mxu0 %v1247
    %1362 = vmatprep.subr.mxu0 0.0
    %1363 = vmatpush2.msra.mxu0 %v1246
    %1364 = vmatprep.subr.mxu0 0.0
    %1365 = vmatpush2.msra.mxu0 %v1245
    %1366 = vmatprep.subr.mxu0 0.0
    %1367 = vmatpush2.msra.mxu0 %v1244
    %1368 = vmatprep.subr.mxu0 0.0
    %1369 = vmatpush2.msra.mxu0 %v1243
    %1370 = vmatprep.subr.mxu0 0.0
    %1371 = vmatpush2.msra.mxu0 %v1242
    %1372 = vmatprep.subr.mxu0 0.0
    %1373 = vmatpush2.msra.mxu0 %v1241
    %1374 = vmatprep.subr.mxu0 0.0
    %1375 = vmatpush2.msra.mxu0 %v1240
    %1376 = vmatprep.subr.mxu0 0.0
    %1377 = vmatpush2.msra.mxu0 %v1239
    %1378 = vmatprep.subr.mxu0 0.0
    %1379 = vmatpush2.msra.mxu0 %v1238
    %1380 = vmatprep.subr.mxu0 0.0
    %1381 = vmatpush2.msra.mxu0 %v1237
    %1382 = vmatprep.subr.mxu0 0.0
    %1383 = vmatpush2.msra.mxu0 %v1236
    %1384 = vmatprep.subr.mxu0 0.0
    %1385 = vmatpush2.msra.mxu0 %v1235
    %1386 = vmatprep.subr.mxu0 0.0
    %1387 = vmatpush2.msra.mxu0 %v1234
    %1388 = vmatprep.subr.mxu0 0.0
    %1389 = vmatpush2.msra.mxu0 %v1233
    %1390 = vmatprep.mubr.f32.mxu0 %v1184
    %1391 = vmatmul.mubr.f32.gmra.mxu0 %v1183
    %v1392 = vpop.f32.mrf.mxu0
    %v1393 = vadd.f32 %v1323, %v1392
    %v1394 = vpop.f32.mrf.mxu0
    %1395 = vdwg.mxu0
    %1397 = vrot.lane.b32.xlu0 %v536, 32
    %v1398 = vpop.permute.xlu0 %1397
    %1401 = vrot.lane.b32.xlu0 %v1393, 40
    %v1402 = vpop.permute.xlu0 %1401
    %v1404 = vsel %vm196, %v175, %v1398
    %vm1405 = vcmask 326656
    %v1406 = vsel %vm1405, %v1404, %v1402
    %vm1407 = vcmask 343040
    %v1408 = vsel %vm1407, %v1406, 0.0
    %1409 = vst [vmem:[#allocation7] sm:$0xff] %v1408
    // Predicated region
    $region86: #{tpu_custom_call.1} parent=1 // pred_check
      _
    $region87: #{tpu_custom_call.1} parent=1 // pred_check_branch
      %1411 = sbr.rel (0) target = $region89
    $region88: #{tpu_custom_call.1} parent=1 // pred_region
      %s1413 = ssub.s32 128, 128
      %1414 = vsyncadd [#allocation4], %s1413
      %s1416 = sshll.u32 [#allocation7], 4
      %s1417 = int_to_ptr.vmem [resolvable:$true] %s1416
      %1419 = dma.vmem_to_hbm [thread:$0]  %s1417, 128, %s19, [#allocation4]
    $region89: #{tpu_custom_call.1} parent=1 // pred_fallthru
      _
    // Predicated region
    $region90: #{tpu_custom_call.1} parent=1 // pred_check
      _
    $region91: #{tpu_custom_call.1} parent=1 // pred_check_branch
      %1421 = sbr.rel (0) target = $region93
    $region92: #{tpu_custom_call.1} parent=1 // pred_region
      %1422 = dma.done [#allocation4], 128
    $region93: #{tpu_custom_call.1} parent=1 // pred_fallthru
      _
    %1423 = vsyncpa [#allocation3], 1
    %1424 = vsyncpa [#allocation6], 1
    %1425 = vsyncpa [#allocation4], 1

</llo_original>
